<compile_context>
chip_gen: v6e
topology: v6e:2x2x1
jax: 0.10.0
libtpu: 0.0.40
codegen_flags: <defaults>
</compile_context>

<pallas_src>
import functools

import jax
import jax.numpy as jnp
from jax.experimental import pallas as pl
from jax.experimental.pallas import tpu as pltpu


def generate_lbcnn_filters(key, size, sparcity=0.9):
    """JAX port of generate_lbcnn_filters: +/-1 bernoulli, sparsified to 0."""
    k_bern, k_mask = jax.random.split(key)
    filters = jax.random.bernoulli(k_bern, 0.5, size).astype(jnp.float32) * 2.0 - 1.0
    mask = jax.random.uniform(k_mask, size) > sparcity
    return jnp.where(mask, 0.0, filters)


def _round_up(a, b):
    return (a + b - 1) // b * b


def _rbc_kernel(x_ref, w_ref, o_ref, *, K, W_pad, per_group):
    # x_ref: (ct, nt, L_x)                    padded+flattened input planes (VMEM)
    # w_ref: (C_out * K * K,)                 whole binary filter bank, flat (SMEM)
    # o_ref: (ct, per_group, nt, L_out_pad)   flattened output planes (VMEM)
    #
    # Flattened-plane conv: for output pixel (i, j), flat index m = i*W_pad + j and
    # the tap (kh, kw) source is m + kh*W_pad + kw — one contiguous lane slice per
    # tap. Columns j >= W_out hold cross-row garbage and are sliced off in the
    # wrapper, as are the lane/batch padding regions.
    ct, nt, _ = x_ref.shape
    L_out_pad = o_ref.shape[-1]
    cb = pl.program_id(0)                        # channel-block index

    for c in range(ct):                          # static unroll over channels in block
        g = cb * ct + c                          # group (= input channel) index
        # Register accumulators: one per output channel of this group.
        accs = [jnp.zeros((nt, L_out_pad), jnp.float32) for _ in range(per_group)]
        for kh in range(K):
            for kw in range(K):
                s = kh * W_pad + kw              # static flat tap offset
                xs = x_ref[c, :, s:s + L_out_pad]        # loaded once, reused per_group x
                for f in range(per_group):
                    w_s = w_ref[(g * per_group + f) * (K * K) + kh * K + kw]
                    accs[f] = accs[f] + xs * w_s          # unconditional VPU FMA
        for f in range(per_group):               # exactly one store per output channel
            o_ref[c, f, :, :] = accs[f].astype(o_ref.dtype)


def random_binary_convolution(x, weight, *, padding=0,
                              vmem_budget_bytes=24 * 1024 * 1024):
    """Forward pass of RandomBinaryConvolution.

    x:      (N, C_in, H, W)   float32, NCHW
    weight: (C_out, 1, K, K)  float32 (grouped conv, groups = C_in)
    stride is always 1 (the PyTorch module never forwards `stride` to Conv2d).
    """
    N, C_in, H, W = x.shape
    C_out, wc, K, K2 = weight.shape
    assert K == K2 and wc == 1 and C_out % C_in == 0
    per_group = C_out // C_in

    p = padding
    H_pad, W_pad = H + 2 * p, W + 2 * p
    H_out, W_out = H_pad - K + 1, W_pad - K + 1
    assert H_out > 0 and W_out > 0

    L = H_pad * W_pad                        # flat padded plane length
    L_out_flat = H_out * W_pad               # flat output length (cols >= W_out garbage)
    L_out_pad = _round_up(L_out_flat, 128)   # lane-dense output width
    s_max = (K - 1) * W_pad + (K - 1)        # largest flat tap offset
    L_x = _round_up(max(L, s_max + L_out_pad), 128)   # every tap slice stays in bounds
    N_pad = _round_up(N, 8)                  # sublane-dense batch

    itemsize = jnp.dtype(x.dtype).itemsize

    def step_bytes(ct, nt):
        # Double-buffered input/output blocks + (possibly spilled) working set.
        blk = ct * nt * L_x + ct * per_group * nt * L_out_pad
        work = (per_group + 1) * nt * L_out_pad
        return (2 * blk + work) * itemsize

    # Batch tile: largest multiple-of-8 divisor of N_pad that fits (with ct = 1).
    nt = 8
    for cand in range(N_pad, 7, -8):
        if N_pad % cand == 0 and step_bytes(1, cand) <= vmem_budget_bytes:
            nt = cand
            break
    # Channel tile: largest divisor of C_in that fits; keep >= 2 grid steps so the
    # v7x megacore can shard the parallel grid (no effect on v5e/v6e).
    ct_cap = C_in if (N_pad // nt) >= 2 or C_in == 1 else max(1, C_in // 2)
    ct = 1
    for cand in range(ct_cap, 0, -1):
        if C_in % cand == 0 and step_bytes(cand, nt) <= vmem_budget_bytes:
            ct = cand
            break

    # Layout plumbing, done once in HBM: pad + flatten planes, batch -> sublane dim,
    # flat lengths padded to multiples of 128 lanes.
    x_sp = jnp.pad(x, ((0, 0), (0, 0), (p, p), (p, p)))
    x_flat = x_sp.reshape(N, C_in, L)
    x_flat = jnp.pad(x_flat, ((0, N_pad - N), (0, 0), (0, L_x - L)))
    x_lay = jnp.transpose(x_flat, (1, 0, 2))              # (C_in, N_pad, L_x)

    w_flat = weight.reshape(-1).astype(x.dtype)            # (C_out*K*K,) flat SMEM table

    kernel = functools.partial(_rbc_kernel, K=K, W_pad=W_pad, per_group=per_group)

    out_lay = pl.pallas_call(
        kernel,
        out_shape=jax.ShapeDtypeStruct((C_in, per_group, N_pad, L_out_pad), x.dtype),
        grid_spec=pltpu.PrefetchScalarGridSpec(
            num_scalar_prefetch=0,
            grid=(C_in // ct, N_pad // nt),
            in_specs=[
                # this block's flattened padded input planes (sublane/lane dense)
                pl.BlockSpec((ct, nt, L_x), lambda cb, nb: (cb, nb, 0)),
                # full filter bank, resident in SMEM (scalar taps)
                pl.BlockSpec(memory_space=pltpu.SMEM),
            ],
            out_specs=pl.BlockSpec((ct, per_group, nt, L_out_pad),
                                   lambda cb, nb: (cb, 0, nb, 0)),
        ),
        compiler_params=pltpu.CompilerParams(
            dimension_semantics=("parallel", "parallel"),
            vmem_limit_bytes=48 * 1024 * 1024,   # safe on v7x (64 MiB) and below
        ),
    )(x_lay, w_flat)

    # Back to NCHW: drop batch/lane padding, drop garbage columns, merge channels.
    out = out_lay[:, :, :N, :L_out_flat].reshape(C_in, per_group, N, H_out, W_pad)
    out = out[..., :W_out]
    out = jnp.transpose(out, (2, 0, 1, 3, 4)).reshape(N, C_out, H_out, W_out)
    return out


def _reference_conv(x, weight, *, padding=0):
    # Grouped conv reference via XLA (groups = C_in).
    C_in = x.shape[1]
    return jax.lax.conv_general_dilated(
        x, weight,
        window_strides=(1, 1),
        padding=[(padding, padding), (padding, padding)],
        dimension_numbers=("NCHW", "OIHW", "NCHW"),
        feature_group_count=C_in,
    )


if __name__ == "__main__":
    key = jax.random.PRNGKey(0)
    k_x, k_w = jax.random.split(key)

    # Small shapes consistent with the module:
    # in_channels=4, out_channels=8 (2 filters per group), kernel_size=3, padding=1
    N, C_in, H, W = 2, 4, 16, 16
    C_out, K, padding, sparcity = 8, 3, 1, 0.9

    x = jax.random.normal(k_x, (N, C_in, H, W), dtype=jnp.float32)
    # nn.Conv2d(groups=in_channels) weight shape: (out_channels, 1, K, K)
    weight = generate_lbcnn_filters(k_w, (C_out, 1, K, K), sparcity)

    out = jax.block_until_ready(random_binary_convolution(x, weight, padding=padding))
    ref = jax.block_until_ready(_reference_conv(x, weight, padding=padding))

    assert out.shape == ref.shape, (out.shape, ref.shape)
    assert jnp.allclose(out, ref, atol=1e-5, rtol=1e-5), float(jnp.max(jnp.abs(out - ref)))

    print("KERNEL_OK")
</pallas_src>

<mosaic_0001>
module attributes {stable_mosaic.version = 11 : i64} {
  func.func @_rbc_kernel(%arg0: i32, %arg1: i32, %arg2: memref<2x8x512xf32, #tpu.memory_space<vmem>>, %arg3: memref<72xf32, #tpu.memory_space<smem>>, %arg4: memref<2x2x8x384xf32, #tpu.memory_space<vmem>>) attributes {dimension_semantics = [#tpu.dimension_semantics<parallel>, #tpu.dimension_semantics<parallel>], iteration_bounds = array<i64: 2, 1>, scalar_prefetch = 0 : i64, scratch_operands = 0 : i64, tpu.core_type = #tpu.core_type<tc>, window_params = [{transform_indices = @transform_0, window_bounds = array<i64: 2, 8, 512>}, {transform_indices = @transform_1, window_bounds = array<i64: 72>}, {transform_indices = @transform_2, window_bounds = array<i64: 2, 2, 8, 384>}]} {
    %c2_i32 = arith.constant 2 : i32
    %0 = arith.muli %arg0, %c2_i32 : i32
    %c0_i32 = arith.constant 0 : i32
    %1 = arith.addi %0, %c0_i32 : i32
    %cst = arith.constant 0.000000e+00 : f32
    %2 = vector.broadcast %cst : f32 to vector<8x384xf32>
    %cst_0 = arith.constant 0.000000e+00 : f32
    %3 = vector.broadcast %cst_0 : f32 to vector<8x384xf32>
    %c0 = arith.constant 0 : index
    %c0_1 = arith.constant 0 : index
    %c0_2 = arith.constant 0 : index
    %4 = vector.load %arg2[%c0, %c0_1, %c0_2] : memref<2x8x512xf32, #tpu.memory_space<vmem>>, vector<1x8x384xf32>
    %5 = vector.shape_cast %4 : vector<1x8x384xf32> to vector<8x384xf32>
    %c2_i32_3 = arith.constant 2 : i32
    %6 = arith.muli %1, %c2_i32_3 : i32
    %c0_i32_4 = arith.constant 0 : i32
    %7 = arith.addi %6, %c0_i32_4 : i32
    %c9_i32 = arith.constant 9 : i32
    %8 = arith.muli %7, %c9_i32 : i32
    %c0_i32_5 = arith.constant 0 : i32
    %9 = arith.addi %8, %c0_i32_5 : i32
    %c0_i32_6 = arith.constant 0 : i32
    %10 = arith.addi %9, %c0_i32_6 : i32
    %11 = arith.index_cast %10 : i32 to index
    %12 = memref.load %arg3[%11] : memref<72xf32, #tpu.memory_space<smem>>
    %13 = vector.broadcast %12 : f32 to vector<8x384xf32>
    %14 = arith.mulf %5, %13 : vector<8x384xf32>
    %15 = arith.addf %2, %14 : vector<8x384xf32>
    %c2_i32_7 = arith.constant 2 : i32
    %16 = arith.muli %1, %c2_i32_7 : i32
    %c1_i32 = arith.constant 1 : i32
    %17 = arith.addi %16, %c1_i32 : i32
    %c9_i32_8 = arith.constant 9 : i32
    %18 = arith.muli %17, %c9_i32_8 : i32
    %c0_i32_9 = arith.constant 0 : i32
    %19 = arith.addi %18, %c0_i32_9 : i32
    %c0_i32_10 = arith.constant 0 : i32
    %20 = arith.addi %19, %c0_i32_10 : i32
    %21 = arith.index_cast %20 : i32 to index
    %22 = memref.load %arg3[%21] : memref<72xf32, #tpu.memory_space<smem>>
    %23 = vector.broadcast %22 : f32 to vector<8x384xf32>
    %24 = arith.mulf %5, %23 : vector<8x384xf32>
    %25 = arith.addf %3, %24 : vector<8x384xf32>
    %c0_11 = arith.constant 0 : index
    %c0_12 = arith.constant 0 : index
    %c1 = arith.constant 1 : index
    %26 = vector.load %arg2[%c0_11, %c0_12, %c1] : memref<2x8x512xf32, #tpu.memory_space<vmem>>, vector<1x8x384xf32>
    %27 = vector.shape_cast %26 : vector<1x8x384xf32> to vector<8x384xf32>
    %c2_i32_13 = arith.constant 2 : i32
    %28 = arith.muli %1, %c2_i32_13 : i32
    %c0_i32_14 = arith.constant 0 : i32
    %29 = arith.addi %28, %c0_i32_14 : i32
    %c9_i32_15 = arith.constant 9 : i32
    %30 = arith.muli %29, %c9_i32_15 : i32
    %c0_i32_16 = arith.constant 0 : i32
    %31 = arith.addi %30, %c0_i32_16 : i32
    %c1_i32_17 = arith.constant 1 : i32
    %32 = arith.addi %31, %c1_i32_17 : i32
    %33 = arith.index_cast %32 : i32 to index
    %34 = memref.load %arg3[%33] : memref<72xf32, #tpu.memory_space<smem>>
    %35 = vector.broadcast %34 : f32 to vector<8x384xf32>
    %36 = arith.mulf %27, %35 : vector<8x384xf32>
    %37 = arith.addf %15, %36 : vector<8x384xf32>
    %c2_i32_18 = arith.constant 2 : i32
    %38 = arith.muli %1, %c2_i32_18 : i32
    %c1_i32_19 = arith.constant 1 : i32
    %39 = arith.addi %38, %c1_i32_19 : i32
    %c9_i32_20 = arith.constant 9 : i32
    %40 = arith.muli %39, %c9_i32_20 : i32
    %c0_i32_21 = arith.constant 0 : i32
    %41 = arith.addi %40, %c0_i32_21 : i32
    %c1_i32_22 = arith.constant 1 : i32
    %42 = arith.addi %41, %c1_i32_22 : i32
    %43 = arith.index_cast %42 : i32 to index
    %44 = memref.load %arg3[%43] : memref<72xf32, #tpu.memory_space<smem>>
    %45 = vector.broadcast %44 : f32 to vector<8x384xf32>
    %46 = arith.mulf %27, %45 : vector<8x384xf32>
    %47 = arith.addf %25, %46 : vector<8x384xf32>
    %c0_23 = arith.constant 0 : index
    %c0_24 = arith.constant 0 : index
    %c2 = arith.constant 2 : index
    %48 = vector.load %arg2[%c0_23, %c0_24, %c2] : memref<2x8x512xf32, #tpu.memory_space<vmem>>, vector<1x8x384xf32>
    %49 = vector.shape_cast %48 : vector<1x8x384xf32> to vector<8x384xf32>
    %c2_i32_25 = arith.constant 2 : i32
    %50 = arith.muli %1, %c2_i32_25 : i32
    %c0_i32_26 = arith.constant 0 : i32
    %51 = arith.addi %50, %c0_i32_26 : i32
    %c9_i32_27 = arith.constant 9 : i32
    %52 = arith.muli %51, %c9_i32_27 : i32
    %c0_i32_28 = arith.constant 0 : i32
    %53 = arith.addi %52, %c0_i32_28 : i32
    %c2_i32_29 = arith.constant 2 : i32
    %54 = arith.addi %53, %c2_i32_29 : i32
    %55 = arith.index_cast %54 : i32 to index
    %56 = memref.load %arg3[%55] : memref<72xf32, #tpu.memory_space<smem>>
    %57 = vector.broadcast %56 : f32 to vector<8x384xf32>
    %58 = arith.mulf %49, %57 : vector<8x384xf32>
    %59 = arith.addf %37, %58 : vector<8x384xf32>
    %c2_i32_30 = arith.constant 2 : i32
    %60 = arith.muli %1, %c2_i32_30 : i32
    %c1_i32_31 = arith.constant 1 : i32
    %61 = arith.addi %60, %c1_i32_31 : i32
    %c9_i32_32 = arith.constant 9 : i32
    %62 = arith.muli %61, %c9_i32_32 : i32
    %c0_i32_33 = arith.constant 0 : i32
    %63 = arith.addi %62, %c0_i32_33 : i32
    %c2_i32_34 = arith.constant 2 : i32
    %64 = arith.addi %63, %c2_i32_34 : i32
    %65 = arith.index_cast %64 : i32 to index
    %66 = memref.load %arg3[%65] : memref<72xf32, #tpu.memory_space<smem>>
    %67 = vector.broadcast %66 : f32 to vector<8x384xf32>
    %68 = arith.mulf %49, %67 : vector<8x384xf32>
    %69 = arith.addf %47, %68 : vector<8x384xf32>
    %c0_35 = arith.constant 0 : index
    %c0_36 = arith.constant 0 : index
    %c18 = arith.constant 18 : index
    %70 = vector.load %arg2[%c0_35, %c0_36, %c18] : memref<2x8x512xf32, #tpu.memory_space<vmem>>, vector<1x8x384xf32>
    %71 = vector.shape_cast %70 : vector<1x8x384xf32> to vector<8x384xf32>
    %c2_i32_37 = arith.constant 2 : i32
    %72 = arith.muli %1, %c2_i32_37 : i32
    %c0_i32_38 = arith.constant 0 : i32
    %73 = arith.addi %72, %c0_i32_38 : i32
    %c9_i32_39 = arith.constant 9 : i32
    %74 = arith.muli %73, %c9_i32_39 : i32
    %c3_i32 = arith.constant 3 : i32
    %75 = arith.addi %74, %c3_i32 : i32
    %c0_i32_40 = arith.constant 0 : i32
    %76 = arith.addi %75, %c0_i32_40 : i32
    %77 = arith.index_cast %76 : i32 to index
    %78 = memref.load %arg3[%77] : memref<72xf32, #tpu.memory_space<smem>>
    %79 = vector.broadcast %78 : f32 to vector<8x384xf32>
    %80 = arith.mulf %71, %79 : vector<8x384xf32>
    %81 = arith.addf %59, %80 : vector<8x384xf32>
    %c2_i32_41 = arith.constant 2 : i32
    %82 = arith.muli %1, %c2_i32_41 : i32
    %c1_i32_42 = arith.constant 1 : i32
    %83 = arith.addi %82, %c1_i32_42 : i32
    %c9_i32_43 = arith.constant 9 : i32
    %84 = arith.muli %83, %c9_i32_43 : i32
    %c3_i32_44 = arith.constant 3 : i32
    %85 = arith.addi %84, %c3_i32_44 : i32
    %c0_i32_45 = arith.constant 0 : i32
    %86 = arith.addi %85, %c0_i32_45 : i32
    %87 = arith.index_cast %86 : i32 to index
    %88 = memref.load %arg3[%87] : memref<72xf32, #tpu.memory_space<smem>>
    %89 = vector.broadcast %88 : f32 to vector<8x384xf32>
    %90 = arith.mulf %71, %89 : vector<8x384xf32>
    %91 = arith.addf %69, %90 : vector<8x384xf32>
    %c0_46 = arith.constant 0 : index
    %c0_47 = arith.constant 0 : index
    %c19 = arith.constant 19 : index
    %92 = vector.load %arg2[%c0_46, %c0_47, %c19] : memref<2x8x512xf32, #tpu.memory_space<vmem>>, vector<1x8x384xf32>
    %93 = vector.shape_cast %92 : vector<1x8x384xf32> to vector<8x384xf32>
    %c2_i32_48 = arith.constant 2 : i32
    %94 = arith.muli %1, %c2_i32_48 : i32
    %c0_i32_49 = arith.constant 0 : i32
    %95 = arith.addi %94, %c0_i32_49 : i32
    %c9_i32_50 = arith.constant 9 : i32
    %96 = arith.muli %95, %c9_i32_50 : i32
    %c3_i32_51 = arith.constant 3 : i32
    %97 = arith.addi %96, %c3_i32_51 : i32
    %c1_i32_52 = arith.constant 1 : i32
    %98 = arith.addi %97, %c1_i32_52 : i32
    %99 = arith.index_cast %98 : i32 to index
    %100 = memref.load %arg3[%99] : memref<72xf32, #tpu.memory_space<smem>>
    %101 = vector.broadcast %100 : f32 to vector<8x384xf32>
    %102 = arith.mulf %93, %101 : vector<8x384xf32>
    %103 = arith.addf %81, %102 : vector<8x384xf32>
    %c2_i32_53 = arith.constant 2 : i32
    %104 = arith.muli %1, %c2_i32_53 : i32
    %c1_i32_54 = arith.constant 1 : i32
    %105 = arith.addi %104, %c1_i32_54 : i32
    %c9_i32_55 = arith.constant 9 : i32
    %106 = arith.muli %105, %c9_i32_55 : i32
    %c3_i32_56 = arith.constant 3 : i32
    %107 = arith.addi %106, %c3_i32_56 : i32
    %c1_i32_57 = arith.constant 1 : i32
    %108 = arith.addi %107, %c1_i32_57 : i32
    %109 = arith.index_cast %108 : i32 to index
    %110 = memref.load %arg3[%109] : memref<72xf32, #tpu.memory_space<smem>>
    %111 = vector.broadcast %110 : f32 to vector<8x384xf32>
    %112 = arith.mulf %93, %111 : vector<8x384xf32>
    %113 = arith.addf %91, %112 : vector<8x384xf32>
    %c0_58 = arith.constant 0 : index
    %c0_59 = arith.constant 0 : index
    %c20 = arith.constant 20 : index
    %114 = vector.load %arg2[%c0_58, %c0_59, %c20] : memref<2x8x512xf32, #tpu.memory_space<vmem>>, vector<1x8x384xf32>
    %115 = vector.shape_cast %114 : vector<1x8x384xf32> to vector<8x384xf32>
    %c2_i32_60 = arith.constant 2 : i32
    %116 = arith.muli %1, %c2_i32_60 : i32
    %c0_i32_61 = arith.constant 0 : i32
    %117 = arith.addi %116, %c0_i32_61 : i32
    %c9_i32_62 = arith.constant 9 : i32
    %118 = arith.muli %117, %c9_i32_62 : i32
    %c3_i32_63 = arith.constant 3 : i32
    %119 = arith.addi %118, %c3_i32_63 : i32
    %c2_i32_64 = arith.constant 2 : i32
    %120 = arith.addi %119, %c2_i32_64 : i32
    %121 = arith.index_cast %120 : i32 to index
    %122 = memref.load %arg3[%121] : memref<72xf32, #tpu.memory_space<smem>>
    %123 = vector.broadcast %122 : f32 to vector<8x384xf32>
    %124 = arith.mulf %115, %123 : vector<8x384xf32>
    %125 = arith.addf %103, %124 : vector<8x384xf32>
    %c2_i32_65 = arith.constant 2 : i32
    %126 = arith.muli %1, %c2_i32_65 : i32
    %c1_i32_66 = arith.constant 1 : i32
    %127 = arith.addi %126, %c1_i32_66 : i32
    %c9_i32_67 = arith.constant 9 : i32
    %128 = arith.muli %127, %c9_i32_67 : i32
    %c3_i32_68 = arith.constant 3 : i32
    %129 = arith.addi %128, %c3_i32_68 : i32
    %c2_i32_69 = arith.constant 2 : i32
    %130 = arith.addi %129, %c2_i32_69 : i32
    %131 = arith.index_cast %130 : i32 to index
    %132 = memref.load %arg3[%131] : memref<72xf32, #tpu.memory_space<smem>>
    %133 = vector.broadcast %132 : f32 to vector<8x384xf32>
    %134 = arith.mulf %115, %133 : vector<8x384xf32>
    %135 = arith.addf %113, %134 : vector<8x384xf32>
    %c0_70 = arith.constant 0 : index
    %c0_71 = arith.constant 0 : index
    %c36 = arith.constant 36 : index
    %136 = vector.load %arg2[%c0_70, %c0_71, %c36] : memref<2x8x512xf32, #tpu.memory_space<vmem>>, vector<1x8x384xf32>
    %137 = vector.shape_cast %136 : vector<1x8x384xf32> to vector<8x384xf32>
    %c2_i32_72 = arith.constant 2 : i32
    %138 = arith.muli %1, %c2_i32_72 : i32
    %c0_i32_73 = arith.constant 0 : i32
    %139 = arith.addi %138, %c0_i32_73 : i32
    %c9_i32_74 = arith.constant 9 : i32
    %140 = arith.muli %139, %c9_i32_74 : i32
    %c6_i32 = arith.constant 6 : i32
    %141 = arith.addi %140, %c6_i32 : i32
    %c0_i32_75 = arith.constant 0 : i32
    %142 = arith.addi %141, %c0_i32_75 : i32
    %143 = arith.index_cast %142 : i32 to index
    %144 = memref.load %arg3[%143] : memref<72xf32, #tpu.memory_space<smem>>
    %145 = vector.broadcast %144 : f32 to vector<8x384xf32>
    %146 = arith.mulf %137, %145 : vector<8x384xf32>
    %147 = arith.addf %125, %146 : vector<8x384xf32>
    %c2_i32_76 = arith.constant 2 : i32
    %148 = arith.muli %1, %c2_i32_76 : i32
    %c1_i32_77 = arith.constant 1 : i32
    %149 = arith.addi %148, %c1_i32_77 : i32
    %c9_i32_78 = arith.constant 9 : i32
    %150 = arith.muli %149, %c9_i32_78 : i32
    %c6_i32_79 = arith.constant 6 : i32
    %151 = arith.addi %150, %c6_i32_79 : i32
    %c0_i32_80 = arith.constant 0 : i32
    %152 = arith.addi %151, %c0_i32_80 : i32
    %153 = arith.index_cast %152 : i32 to index
    %154 = memref.load %arg3[%153] : memref<72xf32, #tpu.memory_space<smem>>
    %155 = vector.broadcast %154 : f32 to vector<8x384xf32>
    %156 = arith.mulf %137, %155 : vector<8x384xf32>
    %157 = arith.addf %135, %156 : vector<8x384xf32>
    %c0_81 = arith.constant 0 : index
    %c0_82 = arith.constant 0 : index
    %c37 = arith.constant 37 : index
    %158 = vector.load %arg2[%c0_81, %c0_82, %c37] : memref<2x8x512xf32, #tpu.memory_space<vmem>>, vector<1x8x384xf32>
    %159 = vector.shape_cast %158 : vector<1x8x384xf32> to vector<8x384xf32>
    %c2_i32_83 = arith.constant 2 : i32
    %160 = arith.muli %1, %c2_i32_83 : i32
    %c0_i32_84 = arith.constant 0 : i32
    %161 = arith.addi %160, %c0_i32_84 : i32
    %c9_i32_85 = arith.constant 9 : i32
    %162 = arith.muli %161, %c9_i32_85 : i32
    %c6_i32_86 = arith.constant 6 : i32
    %163 = arith.addi %162, %c6_i32_86 : i32
    %c1_i32_87 = arith.constant 1 : i32
    %164 = arith.addi %163, %c1_i32_87 : i32
    %165 = arith.index_cast %164 : i32 to index
    %166 = memref.load %arg3[%165] : memref<72xf32, #tpu.memory_space<smem>>
    %167 = vector.broadcast %166 : f32 to vector<8x384xf32>
    %168 = arith.mulf %159, %167 : vector<8x384xf32>
    %169 = arith.addf %147, %168 : vector<8x384xf32>
    %c2_i32_88 = arith.constant 2 : i32
    %170 = arith.muli %1, %c2_i32_88 : i32
    %c1_i32_89 = arith.constant 1 : i32
    %171 = arith.addi %170, %c1_i32_89 : i32
    %c9_i32_90 = arith.constant 9 : i32
    %172 = arith.muli %171, %c9_i32_90 : i32
    %c6_i32_91 = arith.constant 6 : i32
    %173 = arith.addi %172, %c6_i32_91 : i32
    %c1_i32_92 = arith.constant 1 : i32
    %174 = arith.addi %173, %c1_i32_92 : i32
    %175 = arith.index_cast %174 : i32 to index
    %176 = memref.load %arg3[%175] : memref<72xf32, #tpu.memory_space<smem>>
    %177 = vector.broadcast %176 : f32 to vector<8x384xf32>
    %178 = arith.mulf %159, %177 : vector<8x384xf32>
    %179 = arith.addf %157, %178 : vector<8x384xf32>
    %c0_93 = arith.constant 0 : index
    %c0_94 = arith.constant 0 : index
    %c38 = arith.constant 38 : index
    %180 = vector.load %arg2[%c0_93, %c0_94, %c38] : memref<2x8x512xf32, #tpu.memory_space<vmem>>, vector<1x8x384xf32>
    %181 = vector.shape_cast %180 : vector<1x8x384xf32> to vector<8x384xf32>
    %c2_i32_95 = arith.constant 2 : i32
    %182 = arith.muli %1, %c2_i32_95 : i32
    %c0_i32_96 = arith.constant 0 : i32
    %183 = arith.addi %182, %c0_i32_96 : i32
    %c9_i32_97 = arith.constant 9 : i32
    %184 = arith.muli %183, %c9_i32_97 : i32
    %c6_i32_98 = arith.constant 6 : i32
    %185 = arith.addi %184, %c6_i32_98 : i32
    %c2_i32_99 = arith.constant 2 : i32
    %186 = arith.addi %185, %c2_i32_99 : i32
    %187 = arith.index_cast %186 : i32 to index
    %188 = memref.load %arg3[%187] : memref<72xf32, #tpu.memory_space<smem>>
    %189 = vector.broadcast %188 : f32 to vector<8x384xf32>
    %190 = arith.mulf %181, %189 : vector<8x384xf32>
    %191 = arith.addf %169, %190 : vector<8x384xf32>
    %c2_i32_100 = arith.constant 2 : i32
    %192 = arith.muli %1, %c2_i32_100 : i32
    %c1_i32_101 = arith.constant 1 : i32
    %193 = arith.addi %192, %c1_i32_101 : i32
    %c9_i32_102 = arith.constant 9 : i32
    %194 = arith.muli %193, %c9_i32_102 : i32
    %c6_i32_103 = arith.constant 6 : i32
    %195 = arith.addi %194, %c6_i32_103 : i32
    %c2_i32_104 = arith.constant 2 : i32
    %196 = arith.addi %195, %c2_i32_104 : i32
    %197 = arith.index_cast %196 : i32 to index
    %198 = memref.load %arg3[%197] : memref<72xf32, #tpu.memory_space<smem>>
    %199 = vector.broadcast %198 : f32 to vector<8x384xf32>
    %200 = arith.mulf %181, %199 : vector<8x384xf32>
    %201 = arith.addf %179, %200 : vector<8x384xf32>
    %c0_105 = arith.constant 0 : index
    %c0_106 = arith.constant 0 : index
    %c0_107 = arith.constant 0 : index
    %c0_108 = arith.constant 0 : index
    %202 = vector.load %arg4[%c0_105, %c0_106, %c0_107, %c0_108] : memref<2x2x8x384xf32, #tpu.memory_space<vmem>>, vector<1x1x8x384xf32>
    %203 = vector.shape_cast %202 : vector<1x1x8x384xf32> to vector<8x384xf32>
    %204 = vector.shape_cast %191 : vector<8x384xf32> to vector<1x1x8x384xf32>
    tpu.vector_store %arg4[%c0_105, %c0_106, %c0_107, %c0_108], %204 {strides = array<i32>} : memref<2x2x8x384xf32, #tpu.memory_space<vmem>>, vector<1x1x8x384xf32>,
    %c0_109 = arith.constant 0 : index
    %c1_110 = arith.constant 1 : index
    %c0_111 = arith.constant 0 : index
    %c0_112 = arith.constant 0 : index
    %205 = vector.load %arg4[%c0_109, %c1_110, %c0_111, %c0_112] : memref<2x2x8x384xf32, #tpu.memory_space<vmem>>, vector<1x1x8x384xf32>
    %206 = vector.shape_cast %205 : vector<1x1x8x384xf32> to vector<8x384xf32>
    %207 = vector.shape_cast %201 : vector<8x384xf32> to vector<1x1x8x384xf32>
    tpu.vector_store %arg4[%c0_109, %c1_110, %c0_111, %c0_112], %207 {strides = array<i32>} : memref<2x2x8x384xf32, #tpu.memory_space<vmem>>, vector<1x1x8x384xf32>,
    %c2_i32_113 = arith.constant 2 : i32
    %208 = arith.muli %arg0, %c2_i32_113 : i32
    %c1_i32_114 = arith.constant 1 : i32
    %209 = arith.addi %208, %c1_i32_114 : i32
    %cst_115 = arith.constant 0.000000e+00 : f32
    %210 = vector.broadcast %cst_115 : f32 to vector<8x384xf32>
    %cst_116 = arith.constant 0.000000e+00 : f32
    %211 = vector.broadcast %cst_116 : f32 to vector<8x384xf32>
    %c1_117 = arith.constant 1 : index
    %c0_118 = arith.constant 0 : index
    %c0_119 = arith.constant 0 : index
    %212 = vector.load %arg2[%c1_117, %c0_118, %c0_119] : memref<2x8x512xf32, #tpu.memory_space<vmem>>, vector<1x8x384xf32>
    %213 = vector.shape_cast %212 : vector<1x8x384xf32> to vector<8x384xf32>
    %c2_i32_120 = arith.constant 2 : i32
    %214 = arith.muli %209, %c2_i32_120 : i32
    %c0_i32_121 = arith.constant 0 : i32
    %215 = arith.addi %214, %c0_i32_121 : i32
    %c9_i32_122 = arith.constant 9 : i32
    %216 = arith.muli %215, %c9_i32_122 : i32
    %c0_i32_123 = arith.constant 0 : i32
    %217 = arith.addi %216, %c0_i32_123 : i32
    %c0_i32_124 = arith.constant 0 : i32
    %218 = arith.addi %217, %c0_i32_124 : i32
    %219 = arith.index_cast %218 : i32 to index
    %220 = memref.load %arg3[%219] : memref<72xf32, #tpu.memory_space<smem>>
    %221 = vector.broadcast %220 : f32 to vector<8x384xf32>
    %222 = arith.mulf %213, %221 : vector<8x384xf32>
    %223 = arith.addf %210, %222 : vector<8x384xf32>
    %c2_i32_125 = arith.constant 2 : i32
    %224 = arith.muli %209, %c2_i32_125 : i32
    %c1_i32_126 = arith.constant 1 : i32
    %225 = arith.addi %224, %c1_i32_126 : i32
    %c9_i32_127 = arith.constant 9 : i32
    %226 = arith.muli %225, %c9_i32_127 : i32
    %c0_i32_128 = arith.constant 0 : i32
    %227 = arith.addi %226, %c0_i32_128 : i32
    %c0_i32_129 = arith.constant 0 : i32
    %228 = arith.addi %227, %c0_i32_129 : i32
    %229 = arith.index_cast %228 : i32 to index
    %230 = memref.load %arg3[%229] : memref<72xf32, #tpu.memory_space<smem>>
    %231 = vector.broadcast %230 : f32 to vector<8x384xf32>
    %232 = arith.mulf %213, %231 : vector<8x384xf32>
    %233 = arith.addf %211, %232 : vector<8x384xf32>
    %c1_130 = arith.constant 1 : index
    %c0_131 = arith.constant 0 : index
    %c1_132 = arith.constant 1 : index
    %234 = vector.load %arg2[%c1_130, %c0_131, %c1_132] : memref<2x8x512xf32, #tpu.memory_space<vmem>>, vector<1x8x384xf32>
    %235 = vector.shape_cast %234 : vector<1x8x384xf32> to vector<8x384xf32>
    %c2_i32_133 = arith.constant 2 : i32
    %236 = arith.muli %209, %c2_i32_133 : i32
    %c0_i32_134 = arith.constant 0 : i32
    %237 = arith.addi %236, %c0_i32_134 : i32
    %c9_i32_135 = arith.constant 9 : i32
    %238 = arith.muli %237, %c9_i32_135 : i32
    %c0_i32_136 = arith.constant 0 : i32
    %239 = arith.addi %238, %c0_i32_136 : i32
    %c1_i32_137 = arith.constant 1 : i32
    %240 = arith.addi %239, %c1_i32_137 : i32
    %241 = arith.index_cast %240 : i32 to index
    %242 = memref.load %arg3[%241] : memref<72xf32, #tpu.memory_space<smem>>
    %243 = vector.broadcast %242 : f32 to vector<8x384xf32>
    %244 = arith.mulf %235, %243 : vector<8x384xf32>
    %245 = arith.addf %223, %244 : vector<8x384xf32>
    %c2_i32_138 = arith.constant 2 : i32
    %246 = arith.muli %209, %c2_i32_138 : i32
    %c1_i32_139 = arith.constant 1 : i32
    %247 = arith.addi %246, %c1_i32_139 : i32
    %c9_i32_140 = arith.constant 9 : i32
    %248 = arith.muli %247, %c9_i32_140 : i32
    %c0_i32_141 = arith.constant 0 : i32
    %249 = arith.addi %248, %c0_i32_141 : i32
    %c1_i32_142 = arith.constant 1 : i32
    %250 = arith.addi %249, %c1_i32_142 : i32
    %251 = arith.index_cast %250 : i32 to index
    %252 = memref.load %arg3[%251] : memref<72xf32, #tpu.memory_space<smem>>
    %253 = vector.broadcast %252 : f32 to vector<8x384xf32>
    %254 = arith.mulf %235, %253 : vector<8x384xf32>
    %255 = arith.addf %233, %254 : vector<8x384xf32>
    %c1_143 = arith.constant 1 : index
    %c0_144 = arith.constant 0 : index
    %c2_145 = arith.constant 2 : index
    %256 = vector.load %arg2[%c1_143, %c0_144, %c2_145] : memref<2x8x512xf32, #tpu.memory_space<vmem>>, vector<1x8x384xf32>
    %257 = vector.shape_cast %256 : vector<1x8x384xf32> to vector<8x384xf32>
    %c2_i32_146 = arith.constant 2 : i32
    %258 = arith.muli %209, %c2_i32_146 : i32
    %c0_i32_147 = arith.constant 0 : i32
    %259 = arith.addi %258, %c0_i32_147 : i32
    %c9_i32_148 = arith.constant 9 : i32
    %260 = arith.muli %259, %c9_i32_148 : i32
    %c0_i32_149 = arith.constant 0 : i32
    %261 = arith.addi %260, %c0_i32_149 : i32
    %c2_i32_150 = arith.constant 2 : i32
    %262 = arith.addi %261, %c2_i32_150 : i32
    %263 = arith.index_cast %262 : i32 to index
    %264 = memref.load %arg3[%263] : memref<72xf32, #tpu.memory_space<smem>>
    %265 = vector.broadcast %264 : f32 to vector<8x384xf32>
    %266 = arith.mulf %257, %265 : vector<8x384xf32>
    %267 = arith.addf %245, %266 : vector<8x384xf32>
    %c2_i32_151 = arith.constant 2 : i32
    %268 = arith.muli %209, %c2_i32_151 : i32
    %c1_i32_152 = arith.constant 1 : i32
    %269 = arith.addi %268, %c1_i32_152 : i32
    %c9_i32_153 = arith.constant 9 : i32
    %270 = arith.muli %269, %c9_i32_153 : i32
    %c0_i32_154 = arith.constant 0 : i32
    %271 = arith.addi %270, %c0_i32_154 : i32
    %c2_i32_155 = arith.constant 2 : i32
    %272 = arith.addi %271, %c2_i32_155 : i32
    %273 = arith.index_cast %272 : i32 to index
    %274 = memref.load %arg3[%273] : memref<72xf32, #tpu.memory_space<smem>>
    %275 = vector.broadcast %274 : f32 to vector<8x384xf32>
    %276 = arith.mulf %257, %275 : vector<8x384xf32>
    %277 = arith.addf %255, %276 : vector<8x384xf32>
    %c1_156 = arith.constant 1 : index
    %c0_157 = arith.constant 0 : index
    %c18_158 = arith.constant 18 : index
    %278 = vector.load %arg2[%c1_156, %c0_157, %c18_158] : memref<2x8x512xf32, #tpu.memory_space<vmem>>, vector<1x8x384xf32>
    %279 = vector.shape_cast %278 : vector<1x8x384xf32> to vector<8x384xf32>
    %c2_i32_159 = arith.constant 2 : i32
    %280 = arith.muli %209, %c2_i32_159 : i32
    %c0_i32_160 = arith.constant 0 : i32
    %281 = arith.addi %280, %c0_i32_160 : i32
    %c9_i32_161 = arith.constant 9 : i32
    %282 = arith.muli %281, %c9_i32_161 : i32
    %c3_i32_162 = arith.constant 3 : i32
    %283 = arith.addi %282, %c3_i32_162 : i32
    %c0_i32_163 = arith.constant 0 : i32
    %284 = arith.addi %283, %c0_i32_163 : i32
    %285 = arith.index_cast %284 : i32 to index
    %286 = memref.load %arg3[%285] : memref<72xf32, #tpu.memory_space<smem>>
    %287 = vector.broadcast %286 : f32 to vector<8x384xf32>
    %288 = arith.mulf %279, %287 : vector<8x384xf32>
    %289 = arith.addf %267, %288 : vector<8x384xf32>
    %c2_i32_164 = arith.constant 2 : i32
    %290 = arith.muli %209, %c2_i32_164 : i32
    %c1_i32_165 = arith.constant 1 : i32
    %291 = arith.addi %290, %c1_i32_165 : i32
    %c9_i32_166 = arith.constant 9 : i32
    %292 = arith.muli %291, %c9_i32_166 : i32
    %c3_i32_167 = arith.constant 3 : i32
    %293 = arith.addi %292, %c3_i32_167 : i32
    %c0_i32_168 = arith.constant 0 : i32
    %294 = arith.addi %293, %c0_i32_168 : i32
    %295 = arith.index_cast %294 : i32 to index
    %296 = memref.load %arg3[%295] : memref<72xf32, #tpu.memory_space<smem>>
    %297 = vector.broadcast %296 : f32 to vector<8x384xf32>
    %298 = arith.mulf %279, %297 : vector<8x384xf32>
    %299 = arith.addf %277, %298 : vector<8x384xf32>
    %c1_169 = arith.constant 1 : index
    %c0_170 = arith.constant 0 : index
    %c19_171 = arith.constant 19 : index
    %300 = vector.load %arg2[%c1_169, %c0_170, %c19_171] : memref<2x8x512xf32, #tpu.memory_space<vmem>>, vector<1x8x384xf32>
    %301 = vector.shape_cast %300 : vector<1x8x384xf32> to vector<8x384xf32>
    %c2_i32_172 = arith.constant 2 : i32
    %302 = arith.muli %209, %c2_i32_172 : i32
    %c0_i32_173 = arith.constant 0 : i32
    %303 = arith.addi %302, %c0_i32_173 : i32
    %c9_i32_174 = arith.constant 9 : i32
    %304 = arith.muli %303, %c9_i32_174 : i32
    %c3_i32_175 = arith.constant 3 : i32
    %305 = arith.addi %304, %c3_i32_175 : i32
    %c1_i32_176 = arith.constant 1 : i32
    %306 = arith.addi %305, %c1_i32_176 : i32
    %307 = arith.index_cast %306 : i32 to index
    %308 = memref.load %arg3[%307] : memref<72xf32, #tpu.memory_space<smem>>
    %309 = vector.broadcast %308 : f32 to vector<8x384xf32>
    %310 = arith.mulf %301, %309 : vector<8x384xf32>
    %311 = arith.addf %289, %310 : vector<8x384xf32>
    %c2_i32_177 = arith.constant 2 : i32
    %312 = arith.muli %209, %c2_i32_177 : i32
    %c1_i32_178 = arith.constant 1 : i32
    %313 = arith.addi %312, %c1_i32_178 : i32
    %c9_i32_179 = arith.constant 9 : i32
    %314 = arith.muli %313, %c9_i32_179 : i32
    %c3_i32_180 = arith.constant 3 : i32
    %315 = arith.addi %314, %c3_i32_180 : i32
    %c1_i32_181 = arith.constant 1 : i32
    %316 = arith.addi %315, %c1_i32_181 : i32
    %317 = arith.index_cast %316 : i32 to index
    %318 = memref.load %arg3[%317] : memref<72xf32, #tpu.memory_space<smem>>
    %319 = vector.broadcast %318 : f32 to vector<8x384xf32>
    %320 = arith.mulf %301, %319 : vector<8x384xf32>
    %321 = arith.addf %299, %320 : vector<8x384xf32>
    %c1_182 = arith.constant 1 : index
    %c0_183 = arith.constant 0 : index
    %c20_184 = arith.constant 20 : index
    %322 = vector.load %arg2[%c1_182, %c0_183, %c20_184] : memref<2x8x512xf32, #tpu.memory_space<vmem>>, vector<1x8x384xf32>
    %323 = vector.shape_cast %322 : vector<1x8x384xf32> to vector<8x384xf32>
    %c2_i32_185 = arith.constant 2 : i32
    %324 = arith.muli %209, %c2_i32_185 : i32
    %c0_i32_186 = arith.constant 0 : i32
    %325 = arith.addi %324, %c0_i32_186 : i32
    %c9_i32_187 = arith.constant 9 : i32
    %326 = arith.muli %325, %c9_i32_187 : i32
    %c3_i32_188 = arith.constant 3 : i32
    %327 = arith.addi %326, %c3_i32_188 : i32
    %c2_i32_189 = arith.constant 2 : i32
    %328 = arith.addi %327, %c2_i32_189 : i32
    %329 = arith.index_cast %328 : i32 to index
    %330 = memref.load %arg3[%329] : memref<72xf32, #tpu.memory_space<smem>>
    %331 = vector.broadcast %330 : f32 to vector<8x384xf32>
    %332 = arith.mulf %323, %331 : vector<8x384xf32>
    %333 = arith.addf %311, %332 : vector<8x384xf32>
    %c2_i32_190 = arith.constant 2 : i32
    %334 = arith.muli %209, %c2_i32_190 : i32
    %c1_i32_191 = arith.constant 1 : i32
    %335 = arith.addi %334, %c1_i32_191 : i32
    %c9_i32_192 = arith.constant 9 : i32
    %336 = arith.muli %335, %c9_i32_192 : i32
    %c3_i32_193 = arith.constant 3 : i32
    %337 = arith.addi %336, %c3_i32_193 : i32
    %c2_i32_194 = arith.constant 2 : i32
    %338 = arith.addi %337, %c2_i32_194 : i32
    %339 = arith.index_cast %338 : i32 to index
    %340 = memref.load %arg3[%339] : memref<72xf32, #tpu.memory_space<smem>>
    %341 = vector.broadcast %340 : f32 to vector<8x384xf32>
    %342 = arith.mulf %323, %341 : vector<8x384xf32>
    %343 = arith.addf %321, %342 : vector<8x384xf32>
    %c1_195 = arith.constant 1 : index
    %c0_196 = arith.constant 0 : index
    %c36_197 = arith.constant 36 : index
    %344 = vector.load %arg2[%c1_195, %c0_196, %c36_197] : memref<2x8x512xf32, #tpu.memory_space<vmem>>, vector<1x8x384xf32>
    %345 = vector.shape_cast %344 : vector<1x8x384xf32> to vector<8x384xf32>
    %c2_i32_198 = arith.constant 2 : i32
    %346 = arith.muli %209, %c2_i32_198 : i32
    %c0_i32_199 = arith.constant 0 : i32
    %347 = arith.addi %346, %c0_i32_199 : i32
    %c9_i32_200 = arith.constant 9 : i32
    %348 = arith.muli %347, %c9_i32_200 : i32
    %c6_i32_201 = arith.constant 6 : i32
    %349 = arith.addi %348, %c6_i32_201 : i32
    %c0_i32_202 = arith.constant 0 : i32
    %350 = arith.addi %349, %c0_i32_202 : i32
    %351 = arith.index_cast %350 : i32 to index
    %352 = memref.load %arg3[%351] : memref<72xf32, #tpu.memory_space<smem>>
    %353 = vector.broadcast %352 : f32 to vector<8x384xf32>
    %354 = arith.mulf %345, %353 : vector<8x384xf32>
    %355 = arith.addf %333, %354 : vector<8x384xf32>
    %c2_i32_203 = arith.constant 2 : i32
    %356 = arith.muli %209, %c2_i32_203 : i32
    %c1_i32_204 = arith.constant 1 : i32
    %357 = arith.addi %356, %c1_i32_204 : i32
    %c9_i32_205 = arith.constant 9 : i32
    %358 = arith.muli %357, %c9_i32_205 : i32
    %c6_i32_206 = arith.constant 6 : i32
    %359 = arith.addi %358, %c6_i32_206 : i32
    %c0_i32_207 = arith.constant 0 : i32
    %360 = arith.addi %359, %c0_i32_207 : i32
    %361 = arith.index_cast %360 : i32 to index
    %362 = memref.load %arg3[%361] : memref<72xf32, #tpu.memory_space<smem>>
    %363 = vector.broadcast %362 : f32 to vector<8x384xf32>
    %364 = arith.mulf %345, %363 : vector<8x384xf32>
    %365 = arith.addf %343, %364 : vector<8x384xf32>
    %c1_208 = arith.constant 1 : index
    %c0_209 = arith.constant 0 : index
    %c37_210 = arith.constant 37 : index
    %366 = vector.load %arg2[%c1_208, %c0_209, %c37_210] : memref<2x8x512xf32, #tpu.memory_space<vmem>>, vector<1x8x384xf32>
    %367 = vector.shape_cast %366 : vector<1x8x384xf32> to vector<8x384xf32>
    %c2_i32_211 = arith.constant 2 : i32
    %368 = arith.muli %209, %c2_i32_211 : i32
    %c0_i32_212 = arith.constant 0 : i32
    %369 = arith.addi %368, %c0_i32_212 : i32
    %c9_i32_213 = arith.constant 9 : i32
    %370 = arith.muli %369, %c9_i32_213 : i32
    %c6_i32_214 = arith.constant 6 : i32
    %371 = arith.addi %370, %c6_i32_214 : i32
    %c1_i32_215 = arith.constant 1 : i32
    %372 = arith.addi %371, %c1_i32_215 : i32
    %373 = arith.index_cast %372 : i32 to index
    %374 = memref.load %arg3[%373] : memref<72xf32, #tpu.memory_space<smem>>
    %375 = vector.broadcast %374 : f32 to vector<8x384xf32>
    %376 = arith.mulf %367, %375 : vector<8x384xf32>
    %377 = arith.addf %355, %376 : vector<8x384xf32>
    %c2_i32_216 = arith.constant 2 : i32
    %378 = arith.muli %209, %c2_i32_216 : i32
    %c1_i32_217 = arith.constant 1 : i32
    %379 = arith.addi %378, %c1_i32_217 : i32
    %c9_i32_218 = arith.constant 9 : i32
    %380 = arith.muli %379, %c9_i32_218 : i32
    %c6_i32_219 = arith.constant 6 : i32
    %381 = arith.addi %380, %c6_i32_219 : i32
    %c1_i32_220 = arith.constant 1 : i32
    %382 = arith.addi %381, %c1_i32_220 : i32
    %383 = arith.index_cast %382 : i32 to index
    %384 = memref.load %arg3[%383] : memref<72xf32, #tpu.memory_space<smem>>
    %385 = vector.broadcast %384 : f32 to vector<8x384xf32>
    %386 = arith.mulf %367, %385 : vector<8x384xf32>
    %387 = arith.addf %365, %386 : vector<8x384xf32>
    %c1_221 = arith.constant 1 : index
    %c0_222 = arith.constant 0 : index
    %c38_223 = arith.constant 38 : index
    %388 = vector.load %arg2[%c1_221, %c0_222, %c38_223] : memref<2x8x512xf32, #tpu.memory_space<vmem>>, vector<1x8x384xf32>
    %389 = vector.shape_cast %388 : vector<1x8x384xf32> to vector<8x384xf32>
    %c2_i32_224 = arith.constant 2 : i32
    %390 = arith.muli %209, %c2_i32_224 : i32
    %c0_i32_225 = arith.constant 0 : i32
    %391 = arith.addi %390, %c0_i32_225 : i32
    %c9_i32_226 = arith.constant 9 : i32
    %392 = arith.muli %391, %c9_i32_226 : i32
    %c6_i32_227 = arith.constant 6 : i32
    %393 = arith.addi %392, %c6_i32_227 : i32
    %c2_i32_228 = arith.constant 2 : i32
    %394 = arith.addi %393, %c2_i32_228 : i32
    %395 = arith.index_cast %394 : i32 to index
    %396 = memref.load %arg3[%395] : memref<72xf32, #tpu.memory_space<smem>>
    %397 = vector.broadcast %396 : f32 to vector<8x384xf32>
    %398 = arith.mulf %389, %397 : vector<8x384xf32>
    %399 = arith.addf %377, %398 : vector<8x384xf32>
    %c2_i32_229 = arith.constant 2 : i32
    %400 = arith.muli %209, %c2_i32_229 : i32
    %c1_i32_230 = arith.constant 1 : i32
    %401 = arith.addi %400, %c1_i32_230 : i32
    %c9_i32_231 = arith.constant 9 : i32
    %402 = arith.muli %401, %c9_i32_231 : i32
    %c6_i32_232 = arith.constant 6 : i32
    %403 = arith.addi %402, %c6_i32_232 : i32
    %c2_i32_233 = arith.constant 2 : i32
    %404 = arith.addi %403, %c2_i32_233 : i32
    %405 = arith.index_cast %404 : i32 to index
    %406 = memref.load %arg3[%405] : memref<72xf32, #tpu.memory_space<smem>>
    %407 = vector.broadcast %406 : f32 to vector<8x384xf32>
    %408 = arith.mulf %389, %407 : vector<8x384xf32>
    %409 = arith.addf %387, %408 : vector<8x384xf32>
    %c1_234 = arith.constant 1 : index
    %c0_235 = arith.constant 0 : index
    %c0_236 = arith.constant 0 : index
    %c0_237 = arith.constant 0 : index
    %410 = vector.load %arg4[%c1_234, %c0_235, %c0_236, %c0_237] : memref<2x2x8x384xf32, #tpu.memory_space<vmem>>, vector<1x1x8x384xf32>
    %411 = vector.shape_cast %410 : vector<1x1x8x384xf32> to vector<8x384xf32>
    %412 = vector.shape_cast %399 : vector<8x384xf32> to vector<1x1x8x384xf32>
    tpu.vector_store %arg4[%c1_234, %c0_235, %c0_236, %c0_237], %412 {strides = array<i32>} : memref<2x2x8x384xf32, #tpu.memory_space<vmem>>, vector<1x1x8x384xf32>,
    %c1_238 = arith.constant 1 : index
    %c1_239 = arith.constant 1 : index
    %c0_240 = arith.constant 0 : index
    %c0_241 = arith.constant 0 : index
    %413 = vector.load %arg4[%c1_238, %c1_239, %c0_240, %c0_241] : memref<2x2x8x384xf32, #tpu.memory_space<vmem>>, vector<1x1x8x384xf32>
    %414 = vector.shape_cast %413 : vector<1x1x8x384xf32> to vector<8x384xf32>
    %415 = vector.shape_cast %409 : vector<8x384xf32> to vector<1x1x8x384xf32>
    tpu.vector_store %arg4[%c1_238, %c1_239, %c0_240, %c0_241], %415 {strides = array<i32>} : memref<2x2x8x384xf32, #tpu.memory_space<vmem>>, vector<1x1x8x384xf32>,
    return
  }
  func.func @transform_0(%arg0: i32, %arg1: i32) -> (i32, i32, i32) {
    %c0_i32 = arith.constant 0 : i32
    %c0_i32_0 = arith.constant 0 : i32
    return %arg0, %arg1, %c0_i32 : i32, i32, i32
  }
  func.func @transform_1(%arg0: i32, %arg1: i32) -> i32 {
    %c0_i32 = arith.constant 0 : i32
    %c0_i32_0 = arith.constant 0 : i32
    return %c0_i32 : i32
  }
  func.func @transform_2(%arg0: i32, %arg1: i32) -> (i32, i32, i32, i32) {
    %c0_i32 = arith.constant 0 : i32
    %c0_i32_0 = arith.constant 0 : i32
    %c0_i32_1 = arith.constant 0 : i32
    return %arg0, %c0_i32, %arg1, %c0_i32_0 : i32, i32, i32, i32
  }
}

</mosaic_0001>

<llo_original>
// kernel: tpu_custom_call.1
$region0: #{tpu_custom_call.1}
  #allocation0 [shape = 'u32[]', space=smem, size = 0x4, offset = 0x4, fixed_abs, tag = 'smem constant byte address 0x4 - core index']
  #allocation1 [shape = 'u32[144,128]{1,0:T(1,128)}', space=vmem, size = 0x12000, scoped, tag = 'internal scratch']
  %s0 = inlined_call_operand.hbm [shape: f32[4,8,512], index: 0, kind: input, shape index: {}]
  %s1 = inlined_call_operand.vmem [shape: f32[72], index: 1, kind: input, shape index: {}]
  %s2 = inlined_call_operand.hbm [shape: f32[4,2,8,384], index: 2, kind: output, shape index: {}]
  %s3 = sld [smem:[#allocation0]]
  $region49: #{tpu_custom_call.1} parent=0
    _
  %s5 = ssub.s32 1, %s3
  %s6 = scalar_select 0, %s5, %s3
  $region1: #{tpu_custom_call.1} parent=0
    #allocation2 [shape = 'u8[65536]{0}', space=vmem, size = 0x10000, scoped, tag = 'input window, operand 0']
    #allocation3 [shape = 's32[2]{0}', space=sflag, size = 0x8, scoped, tag = 'scoped memory for tpu_custom_call.1']
    #allocation4 [shape = 's32[2]{0}', space=sflag, size = 0x8, scoped, tag = 'scoped memory for tpu_custom_call.1']
    #allocation5 [shape = 's32[2]{0}', space=sflag, size = 0x8, scoped, tag = 'scoped memory for tpu_custom_call.1']
    #allocation6 [shape = 'u8[512]{0}', space=smem, size = 0x200, scoped, tag = 'input window, operand 1, single buffered']
    #allocation7 [shape = 'u8[98304]{0}', space=vmem, size = 0x18000, scoped, tag = 'output window, operand 0']
    %7 = vsyncpa [#allocation3], 0
    %s8 = scalar_lea.sflag [#allocation3], 1
    %9 = vsyncpa %s8, 0
    %10 = vsyncpa [#allocation5], 0
    %11 = vsyncpa [#allocation4], 0
    %s12 = scalar_lea.sflag [#allocation4], 1
    %13 = vsyncpa %s12, 0
    loop: start=0, step=1, limit=4
    $region2: #{tpu_custom_call.1} parent=1 // loop_pre_header
      _
    $region3: #{tpu_custom_call.1} parent=1 // loop_header
      %s15 = sphi 0, %s19
      %p16 = scmp.ge.s32.totalorder %s15, 4
      %s22 = sphi 0, %s34
      %s23 = sphi 0, %s30
      %s24 = sphi 0, %s22
      %s25 = sphi 0, %s23
      %s26 = sphi 0, %s24
      %s27 = sphi 0, %s25
      %s39 = sphi 0, %s41
      %s42 = sphi 0, %s39
      %s43 = sphi 0, %s42
      %s59 = sphi 0, %s43
      %s63 = sphi 0, %s63
      %s65 = sphi 0, %s63
      %s66 = sphi 0, %s65
      %s80 = sphi 0, %s66
      %s88 = sphi 0, %s90
      %s91 = sphi 0, %s88
      %s92 = sphi 0, %s91
      %s108 = sphi 0, %s92
    $region4: #{tpu_custom_call.1} parent=1 // loop_header_branch
      %18 = sbr.rel (%p16) target = $region8
    $region5: #{tpu_custom_call.1} parent=1 // loop_body
      %s20 = ssub.s32 %s15, 1
      %s21 = ssub.s32 %s15, 2
      %s28 = sadd.s32 1, %s23
      %p29 = scmp.ge.s32.totalorder %s28, 1
      %s30 = scalar_select %p29, 0, %s28
      %s31 = sadd.s32 1, %s22
      %s32 = scalar_select %p29, %s31, %s22
      %p33 = scmp.ge.s32.totalorder %s32, 2
      %s34 = scalar_select %p33, 0, %s32
      %s35 = ssub.s32 %s22, %s34
      %s36 = ssub.s32 %s23, %s30
      %s37 = sor.u32 %s35, %s36
      %p38 = scmp.eq.s32.totalorder %s37, 0
      %s40 = sadd.s32 %s39, 1
      %s41 = scalar_select %p38, %s39, %s40
      %p44 = pneg %p38
      %p45 = scmp.eq.s32.totalorder %s15, 1
      %p46 = por %p44, %p45
      %p47 = scmp.ne.s32.totalorder %s39, %s42
      %p48 = scmp.eq.s32.totalorder %s15, 0
      %p49 = por %p47, %p48
      %p50 = scmp.ne.s32.totalorder %s39, %s42
      %p51 = scmp.eq.s32.totalorder %s20, 1
      %p52 = por %p50, %p51
      %p53 = scmp.ne.s32.totalorder %s42, %s43
      %p54 = scmp.eq.s32.totalorder %s20, 0
      %p55 = por %p53, %p54
      %p56 = scmp.ne.s32.totalorder %s42, %s43
      %p57 = scmp.eq.s32.totalorder %s21, 1
      %p58 = por %p56, %p57
      %p60 = scmp.ne.s32.totalorder %s43, %s59
      %p61 = scmp.eq.s32.totalorder %s21, 0
      %p62 = por %p60, %p61
      %s64 = sadd.s32 %s63, 1
      %p67 = scmp.eq.s32.totalorder %s15, 1
      %p68 = scmp.ne.s32.totalorder %s63, %s65
      %p69 = scmp.eq.s32.totalorder %s15, 0
      %p70 = por %p68, %p69
      %p71 = scmp.ne.s32.totalorder %s63, %s65
      %p72 = scmp.eq.s32.totalorder %s20, 1
      %p73 = por %p71, %p72
      %p74 = scmp.ne.s32.totalorder %s65, %s66
      %p75 = scmp.eq.s32.totalorder %s20, 0
      %p76 = por %p74, %p75
      %p77 = scmp.ne.s32.totalorder %s65, %s66
      %p78 = scmp.eq.s32.totalorder %s21, 1
      %p79 = por %p77, %p78
      %p81 = scmp.ne.s32.totalorder %s66, %s80
      %p82 = scmp.eq.s32.totalorder %s21, 0
      %p83 = por %p81, %p82
      %s84 = ssub.s32 %s22, %s34
      %s85 = ssub.s32 %s23, %s30
      %s86 = sor.u32 %s84, %s85
      %p87 = scmp.eq.s32.totalorder %s86, 0
      %s89 = sadd.s32 %s88, 1
      %s90 = scalar_select %p87, %s88, %s89
      %p93 = pneg %p87
      %p94 = scmp.eq.s32.totalorder %s15, 1
      %p95 = por %p93, %p94
      %p96 = scmp.ne.s32.totalorder %s88, %s91
      %p97 = scmp.eq.s32.totalorder %s15, 0
      %p98 = por %p96, %p97
      %p99 = scmp.ne.s32.totalorder %s88, %s91
      %p100 = scmp.eq.s32.totalorder %s20, 1
      %p101 = por %p99, %p100
      %p102 = scmp.ne.s32.totalorder %s91, %s92
      %p103 = scmp.eq.s32.totalorder %s20, 0
      %p104 = por %p102, %p103
      %p105 = scmp.ne.s32.totalorder %s91, %s92
      %p106 = scmp.eq.s32.totalorder %s21, 1
      %p107 = por %p105, %p106
      %p109 = scmp.ne.s32.totalorder %s92, %s108
      %p110 = scmp.eq.s32.totalorder %s21, 0
      %p111 = por %p109, %p110
      %p112 = scmp.le.s32.totalorder 1, %s15
      %p113 = scmp.lt.s32.totalorder %s15, 3
      %p114 = pnand %p112, %p113
      %p115 = pneg %p114
      // Predicated region
      $region9: #{tpu_custom_call.1} parent=5 // pred_check
        _
      $region10: #{tpu_custom_call.1} parent=5 // pred_check_branch
        %117 = sbr.rel (%p114) target = $region12
      $region11: #{tpu_custom_call.1} parent=5 // pred_region
        %s118 = ssub.s32 %s15, 1
        // Predicated region
        $region13: #{tpu_custom_call.1} parent=11 // pred_check
          %p119 = pneg %p76
        $region14: #{tpu_custom_call.1} parent=11 // pred_check_branch
          %121 = sbr.rel (%p119) target = $region16
        $region15: #{tpu_custom_call.1} parent=11 // pred_region
          %s123 = ssub.s32 16, 16
          %124 = vsyncadd [#allocation5], %s123
          %s126 = sshll.u32 %s1, 4
          %s127 = int_to_ptr.vmem [resolvable:$true] %s126
          %129 = dma.vmem_to_smem %s127, 16, [#allocation6], [#allocation5]
        $region16: #{tpu_custom_call.1} parent=11 // pred_fallthru
          _
      $region12: #{tpu_custom_call.1} parent=5 // pred_fallthru
        _
      %p130 = scmp.lt.s32.totalorder %s15, 2
      // Predicated region
      $region17: #{tpu_custom_call.1} parent=5 // pred_check
        %p131 = pneg %p130
      $region18: #{tpu_custom_call.1} parent=5 // pred_check_branch
        %133 = sbr.rel (%p131) target = $region20
      $region19: #{tpu_custom_call.1} parent=5 // pred_region
        // Predicated region
        $region21: #{tpu_custom_call.1} parent=19 // pred_check
          %p134 = pneg %p49
        $region22: #{tpu_custom_call.1} parent=19 // pred_check_branch
          %136 = sbr.rel (%p134) target = $region24
        $region23: #{tpu_custom_call.1} parent=19 // pred_region
          %s137 = sand.u32 %s39, 1
          %s138 = scalar_lea.sflag [#allocation3], %s137
          %s139 = sand.u32 %s39, 1
          %s140 = smul.addr %s139, 64
          %s141 = scalar_lea.vmem [#allocation2], %s140
          %s142 = smul.u32 2, %s22
          %s144 = ssub.s32 1024, 1024
          %145 = vsyncadd %s138, %s144
          %s146 = smul.addr %s23, 4
          %s147 = smul.addr %s142, 4
          %s148 = sadd.s32 %s146, %s147
          %s149 = smul.addr %s148, 128
          %s150 = scalar_lea.hbm %s0, %s149
          %s151 = sshll.u32 %s141, 4
          %s152 = int_to_ptr.vmem [resolvable:$true] %s151
          %157 = dma.hbm_to_vmem [thread:$0]  %s150, 1024, %s152, %s138, 512, 512, 32
        $region24: #{tpu_custom_call.1} parent=19 // pred_fallthru
          _
      $region20: #{tpu_custom_call.1} parent=5 // pred_fallthru
        _
      %p158 = scmp.le.s32.totalorder 1, %s15
      %p159 = scmp.lt.s32.totalorder %s15, 3
      %p160 = pnand %p158, %p159
      %p161 = pneg %p160
      // Predicated region
      $region25: #{tpu_custom_call.1} parent=5 // pred_check
        _
      $region26: #{tpu_custom_call.1} parent=5 // pred_check_branch
        %163 = sbr.rel (%p160) target = $region28
      $region27: #{tpu_custom_call.1} parent=5 // pred_region
        %s164 = ssub.s32 %s15, 1
        %s165 = sand.u32 %s42, 1
        %s166 = scalar_lea.sflag [#allocation3], %s165
        %s167 = sand.u32 %s42, 1
        %s168 = smul.addr %s167, 64
        %s169 = scalar_lea.vmem [#allocation2], %s168
        // Predicated region
        $region29: #{tpu_custom_call.1} parent=27 // pred_check
          %p170 = pneg %p55
        $region30: #{tpu_custom_call.1} parent=27 // pred_check_branch
          %172 = sbr.rel (%p170) target = $region32
        $region31: #{tpu_custom_call.1} parent=27 // pred_region
          %173 = dma.done %s166, 1024
        $region32: #{tpu_custom_call.1} parent=27 // pred_fallthru
          _
        // Predicated region
        $region33: #{tpu_custom_call.1} parent=27 // pred_check
          %p174 = pneg %p76
        $region34: #{tpu_custom_call.1} parent=27 // pred_check_branch
          %176 = sbr.rel (%p174) target = $region36
        $region35: #{tpu_custom_call.1} parent=27 // pred_region
          %177 = dma.done [#allocation5], 16
        $region36: #{tpu_custom_call.1} parent=27 // pred_fallthru
          _
        %178 = sfence
        %s179 = sand.u32 %s42, 1
        %s180 = scalar_lea.sflag [#allocation3], %s179
        %s181 = sand.u32 %s42, 1
        %s182 = smul.addr %s181, 64
        %s183 = scalar_lea.vmem [#allocation2], %s182
        %p184 = pneg %p55
        %p185 = pneg %p52
        %p186 = pneg %p76
        %p187 = pneg %p73
        %p188 = pneg %p104
        %p189 = pneg %p101
        %s190 = sand.u32 %s91, 1
        %s191 = scalar_lea.sflag [#allocation4], %s190
        %s192 = sand.u32 %s91, 1
        %s193 = smul.addr %s192, 96
        %s194 = scalar_lea.vmem [#allocation7], %s193
        %s195 = smul.u32 2, %s24
        %s196 = smul.u32 2, %s24
        %v197 = vld [vmem:[%s169] sm:$0xff]
        %v198 = vld [vmem:[%s169 + $0x8] sm:$0xff]
        %v199 = vld [vmem:[%s169 + $0x10] sm:$0xff]
        %s200 = smul.u32 %s24, 36
        %s201 = sld [smem:[#allocation6 + %s200]]
        %v202 = vstv %s201
        %v203 = vmul.f32 %v197, %v202
        %v204 = vmul.f32 %v198, %v202
        %v205 = vmul.f32 %v199, %v202
        %v206 = vadd.f32 %v203, 0.0
        %v207 = vadd.f32 %v204, 0.0
        %v208 = vadd.f32 %v205, 0.0
        %s209 = smul.u32 %s24, 4
        %s210 = sadd.s32 %s209, 1
        %s211 = smul.u32 %s210, 9
        %s212 = sld [smem:[#allocation6 + %s211]]
        %v213 = vstv %s212
        %v214 = vmul.f32 %v197, %v213
        %v215 = vmul.f32 %v198, %v213
        %v216 = vmul.f32 %v199, %v213
        %v217 = vadd.f32 %v214, 0.0
        %v218 = vadd.f32 %v215, 0.0
        %v219 = vadd.f32 %v216, 0.0
        %v220 = vld [vmem:[%s169] sm:$0xff]
        %v221 = vld [vmem:[%s169 + $0x8] sm:$0xff]
        %v222 = vld [vmem:[%s169 + $0x10] sm:$0xff]
        %v223 = vld [vmem:[%s169 + $0x18] sm:$0xff]
        %s224 = sadd.s32 %s200, 1
        %s225 = sld [smem:[#allocation6 + %s224]]
        %v226 = vstv %s225
        %v227 = vmul.f32 %v220, %v226
        %v228 = vmul.f32 %v221, %v226
        %v229 = vmul.f32 %v222, %v226
        %v230 = vmul.f32 %v223, %v226
        %235 = vrot.lane.b32.xlu0 %v227, 127
        %v236 = vpop.permute.xlu0 %235
        %237 = vrot.lane.b32.xlu0 %v228, 127
        %v238 = vpop.permute.xlu0 %237
        %239 = vrot.lane.b32.xlu0 %v229, 127
        %v240 = vpop.permute.xlu0 %239
        %241 = vrot.lane.b32.xlu0 %v230, 127
        %v242 = vpop.permute.xlu0 %241
        %vm243 = vcmask 1039360
        %v244 = vsel %vm243, %v236, %v238
        %v245 = vsel %vm243, %v238, %v240
        %v246 = vsel %vm243, %v240, %v242
        %v250 = vadd.f32 %v206, %v244
        %v251 = vadd.f32 %v207, %v245
        %v252 = vadd.f32 %v208, %v246
        %s253 = sadd.s32 %s211, 1
        %s254 = sld [smem:[#allocation6 + %s253]]
        %v255 = vstv %s254
        %v256 = vmul.f32 %v220, %v255
        %v257 = vmul.f32 %v221, %v255
        %v258 = vmul.f32 %v222, %v255
        %v259 = vmul.f32 %v223, %v255
        %264 = vrot.lane.b32.xlu0 %v256, 127
        %v265 = vpop.permute.xlu0 %264
        %266 = vrot.lane.b32.xlu0 %v257, 127
        %v267 = vpop.permute.xlu0 %266
        %268 = vrot.lane.b32.xlu0 %v258, 127
        %v269 = vpop.permute.xlu0 %268
        %270 = vrot.lane.b32.xlu0 %v259, 127
        %v271 = vpop.permute.xlu0 %270
        %v272 = vsel %vm243, %v265, %v267
        %v273 = vsel %vm243, %v267, %v269
        %v274 = vsel %vm243, %v269, %v271
        %v278 = vadd.f32 %v217, %v272
        %v279 = vadd.f32 %v218, %v273
        %v280 = vadd.f32 %v219, %v274
        %s281 = sadd.s32 %s200, 2
        %s282 = sld [smem:[#allocation6 + %s281]]
        %v283 = vstv %s282
        %v284 = vmul.f32 %v220, %v283
        %v285 = vmul.f32 %v221, %v283
        %v286 = vmul.f32 %v222, %v283
        %v287 = vmul.f32 %v223, %v283
        %292 = vrot.lane.b32.xlu0 %v284, 126
        %v293 = vpop.permute.xlu0 %292
        %294 = vrot.lane.b32.xlu0 %v285, 126
        %v295 = vpop.permute.xlu0 %294
        %296 = vrot.lane.b32.xlu0 %v286, 126
        %v297 = vpop.permute.xlu0 %296
        %298 = vrot.lane.b32.xlu0 %v287, 126
        %v299 = vpop.permute.xlu0 %298
        %vm300 = vcmask 1031168
        %v301 = vsel %vm300, %v293, %v295
        %v302 = vsel %vm300, %v295, %v297
        %v303 = vsel %vm300, %v297, %v299
        %v307 = vadd.f32 %v250, %v301
        %v308 = vadd.f32 %v251, %v302
        %v309 = vadd.f32 %v252, %v303
        %s310 = sadd.s32 %s211, 2
        %s311 = sld [smem:[#allocation6 + %s310]]
        %v312 = vstv %s311
        %v313 = vmul.f32 %v220, %v312
        %v314 = vmul.f32 %v221, %v312
        %v315 = vmul.f32 %v222, %v312
        %v316 = vmul.f32 %v223, %v312
        %321 = vrot.lane.b32.xlu0 %v313, 126
        %v322 = vpop.permute.xlu0 %321
        %323 = vrot.lane.b32.xlu0 %v314, 126
        %v324 = vpop.permute.xlu0 %323
        %325 = vrot.lane.b32.xlu0 %v315, 126
        %v326 = vpop.permute.xlu0 %325
        %327 = vrot.lane.b32.xlu0 %v316, 126
        %v328 = vpop.permute.xlu0 %327
        %v329 = vsel %vm300, %v322, %v324
        %v330 = vsel %vm300, %v324, %v326
        %v331 = vsel %vm300, %v326, %v328
        %v335 = vadd.f32 %v278, %v329
        %v336 = vadd.f32 %v279, %v330
        %v337 = vadd.f32 %v280, %v331
        %s338 = sadd.s32 %s200, 3
        %s339 = sld [smem:[#allocation6 + %s338]]
        %v340 = vstv %s339
        %v341 = vmul.f32 %v220, %v340
        %v342 = vmul.f32 %v221, %v340
        %v343 = vmul.f32 %v222, %v340
        %v344 = vmul.f32 %v223, %v340
        %349 = vrot.lane.b32.xlu0 %v341, 110
        %v350 = vpop.permute.xlu0 %349
        %351 = vrot.lane.b32.xlu0 %v342, 110
        %v352 = vpop.permute.xlu0 %351
        %353 = vrot.lane.b32.xlu0 %v343, 110
        %v354 = vpop.permute.xlu0 %353
        %355 = vrot.lane.b32.xlu0 %v344, 110
        %v356 = vpop.permute.xlu0 %355
        %vm357 = vcmask 900096
        %v358 = vsel %vm357, %v350, %v352
        %v359 = vsel %vm357, %v352, %v354
        %v360 = vsel %vm357, %v354, %v356
        %v364 = vadd.f32 %v307, %v358
        %v365 = vadd.f32 %v308, %v359
        %v366 = vadd.f32 %v309, %v360
        %s367 = sadd.s32 %s211, 3
        %s368 = sld [smem:[#allocation6 + %s367]]
        %v369 = vstv %s368
        %v370 = vmul.f32 %v220, %v369
        %v371 = vmul.f32 %v221, %v369
        %v372 = vmul.f32 %v222, %v369
        %v373 = vmul.f32 %v223, %v369
        %378 = vrot.lane.b32.xlu0 %v370, 110
        %v379 = vpop.permute.xlu0 %378
        %380 = vrot.lane.b32.xlu0 %v371, 110
        %v381 = vpop.permute.xlu0 %380
        %382 = vrot.lane.b32.xlu0 %v372, 110
        %v383 = vpop.permute.xlu0 %382
        %384 = vrot.lane.b32.xlu0 %v373, 110
        %v385 = vpop.permute.xlu0 %384
        %v386 = vsel %vm357, %v379, %v381
        %v387 = vsel %vm357, %v381, %v383
        %v388 = vsel %vm357, %v383, %v385
        %v392 = vadd.f32 %v335, %v386
        %v393 = vadd.f32 %v336, %v387
        %v394 = vadd.f32 %v337, %v388
        %s395 = sadd.s32 %s200, 4
        %s396 = sld [smem:[#allocation6 + %s395]]
        %v397 = vstv %s396
        %v398 = vmul.f32 %v220, %v397
        %v399 = vmul.f32 %v221, %v397
        %v400 = vmul.f32 %v222, %v397
        %v401 = vmul.f32 %v223, %v397
        %406 = vrot.lane.b32.xlu0 %v398, 109
        %v407 = vpop.permute.xlu0 %406
        %408 = vrot.lane.b32.xlu0 %v399, 109
        %v409 = vpop.permute.xlu0 %408
        %410 = vrot.lane.b32.xlu0 %v400, 109
        %v411 = vpop.permute.xlu0 %410
        %412 = vrot.lane.b32.xlu0 %v401, 109
        %v413 = vpop.permute.xlu0 %412
        %vm414 = vcmask 891904
        %v415 = vsel %vm414, %v407, %v409
        %v416 = vsel %vm414, %v409, %v411
        %v417 = vsel %vm414, %v411, %v413
        %v421 = vadd.f32 %v364, %v415
        %v422 = vadd.f32 %v365, %v416
        %v423 = vadd.f32 %v366, %v417
        %s424 = sadd.s32 %s211, 4
        %s425 = sld [smem:[#allocation6 + %s424]]
        %v426 = vstv %s425
        %v427 = vmul.f32 %v220, %v426
        %v428 = vmul.f32 %v221, %v426
        %v429 = vmul.f32 %v222, %v426
        %v430 = vmul.f32 %v223, %v426
        %435 = vrot.lane.b32.xlu0 %v427, 109
        %v436 = vpop.permute.xlu0 %435
        %437 = vrot.lane.b32.xlu0 %v428, 109
        %v438 = vpop.permute.xlu0 %437
        %439 = vrot.lane.b32.xlu0 %v429, 109
        %v440 = vpop.permute.xlu0 %439
        %441 = vrot.lane.b32.xlu0 %v430, 109
        %v442 = vpop.permute.xlu0 %441
        %v443 = vsel %vm414, %v436, %v438
        %v444 = vsel %vm414, %v438, %v440
        %v445 = vsel %vm414, %v440, %v442
        %v449 = vadd.f32 %v392, %v443
        %v450 = vadd.f32 %v393, %v444
        %v451 = vadd.f32 %v394, %v445
        %s452 = sadd.s32 %s200, 5
        %s453 = sld [smem:[#allocation6 + %s452]]
        %v454 = vstv %s453
        %v455 = vmul.f32 %v220, %v454
        %v456 = vmul.f32 %v221, %v454
        %v457 = vmul.f32 %v222, %v454
        %v458 = vmul.f32 %v223, %v454
        %463 = vrot.lane.b32.xlu0 %v455, 108
        %v464 = vpop.permute.xlu0 %463
        %465 = vrot.lane.b32.xlu0 %v456, 108
        %v466 = vpop.permute.xlu0 %465
        %467 = vrot.lane.b32.xlu0 %v457, 108
        %v468 = vpop.permute.xlu0 %467
        %469 = vrot.lane.b32.xlu0 %v458, 108
        %v470 = vpop.permute.xlu0 %469
        %vm471 = vcmask 883712
        %v472 = vsel %vm471, %v464, %v466
        %v473 = vsel %vm471, %v466, %v468
        %v474 = vsel %vm471, %v468, %v470
        %v478 = vadd.f32 %v421, %v472
        %v479 = vadd.f32 %v422, %v473
        %v480 = vadd.f32 %v423, %v474
        %s481 = sadd.s32 %s211, 5
        %s482 = sld [smem:[#allocation6 + %s481]]
        %v483 = vstv %s482
        %v484 = vmul.f32 %v220, %v483
        %v485 = vmul.f32 %v221, %v483
        %v486 = vmul.f32 %v222, %v483
        %v487 = vmul.f32 %v223, %v483
        %492 = vrot.lane.b32.xlu0 %v484, 108
        %v493 = vpop.permute.xlu0 %492
        %494 = vrot.lane.b32.xlu0 %v485, 108
        %v495 = vpop.permute.xlu0 %494
        %496 = vrot.lane.b32.xlu0 %v486, 108
        %v497 = vpop.permute.xlu0 %496
        %498 = vrot.lane.b32.xlu0 %v487, 108
        %v499 = vpop.permute.xlu0 %498
        %v500 = vsel %vm471, %v493, %v495
        %v501 = vsel %vm471, %v495, %v497
        %v502 = vsel %vm471, %v497, %v499
        %v506 = vadd.f32 %v449, %v500
        %v507 = vadd.f32 %v450, %v501
        %v508 = vadd.f32 %v451, %v502
        %s509 = sadd.s32 %s200, 6
        %s510 = sld [smem:[#allocation6 + %s509]]
        %v511 = vstv %s510
        %v512 = vmul.f32 %v220, %v511
        %v513 = vmul.f32 %v221, %v511
        %v514 = vmul.f32 %v222, %v511
        %v515 = vmul.f32 %v223, %v511
        %520 = vrot.lane.b32.xlu0 %v512, 92
        %v521 = vpop.permute.xlu0 %520
        %522 = vrot.lane.b32.xlu0 %v513, 92
        %v523 = vpop.permute.xlu0 %522
        %524 = vrot.lane.b32.xlu0 %v514, 92
        %v525 = vpop.permute.xlu0 %524
        %526 = vrot.lane.b32.xlu0 %v515, 92
        %v527 = vpop.permute.xlu0 %526
        %vm528 = vcmask 752640
        %v529 = vsel %vm528, %v521, %v523
        %v530 = vsel %vm528, %v523, %v525
        %v531 = vsel %vm528, %v525, %v527
        %v535 = vadd.f32 %v478, %v529
        %v536 = vadd.f32 %v479, %v530
        %v537 = vadd.f32 %v480, %v531
        %s538 = sadd.s32 %s211, 6
        %s539 = sld [smem:[#allocation6 + %s538]]
        %v540 = vstv %s539
        %v541 = vmul.f32 %v220, %v540
        %v542 = vmul.f32 %v221, %v540
        %v543 = vmul.f32 %v222, %v540
        %v544 = vmul.f32 %v223, %v540
        %549 = vrot.lane.b32.xlu0 %v541, 92
        %v550 = vpop.permute.xlu0 %549
        %551 = vrot.lane.b32.xlu0 %v542, 92
        %v552 = vpop.permute.xlu0 %551
        %553 = vrot.lane.b32.xlu0 %v543, 92
        %v554 = vpop.permute.xlu0 %553
        %555 = vrot.lane.b32.xlu0 %v544, 92
        %v556 = vpop.permute.xlu0 %555
        %v557 = vsel %vm528, %v550, %v552
        %v558 = vsel %vm528, %v552, %v554
        %v559 = vsel %vm528, %v554, %v556
        %v563 = vadd.f32 %v506, %v557
        %v564 = vadd.f32 %v507, %v558
        %v565 = vadd.f32 %v508, %v559
        %s566 = sadd.s32 %s200, 7
        %s567 = sld [smem:[#allocation6 + %s566]]
        %v568 = vstv %s567
        %v569 = vmul.f32 %v220, %v568
        %v570 = vmul.f32 %v221, %v568
        %v571 = vmul.f32 %v222, %v568
        %v572 = vmul.f32 %v223, %v568
        %577 = vrot.lane.b32.xlu0 %v569, 91
        %v578 = vpop.permute.xlu0 %577
        %579 = vrot.lane.b32.xlu0 %v570, 91
        %v580 = vpop.permute.xlu0 %579
        %581 = vrot.lane.b32.xlu0 %v571, 91
        %v582 = vpop.permute.xlu0 %581
        %583 = vrot.lane.b32.xlu0 %v572, 91
        %v584 = vpop.permute.xlu0 %583
        %vm585 = vcmask 744448
        %v586 = vsel %vm585, %v578, %v580
        %v587 = vsel %vm585, %v580, %v582
        %v588 = vsel %vm585, %v582, %v584
        %v592 = vadd.f32 %v535, %v586
        %v593 = vadd.f32 %v536, %v587
        %v594 = vadd.f32 %v537, %v588
        %s595 = sadd.s32 %s211, 7
        %s596 = sld [smem:[#allocation6 + %s595]]
        %v597 = vstv %s596
        %v598 = vmul.f32 %v220, %v597
        %v599 = vmul.f32 %v221, %v597
        %v600 = vmul.f32 %v222, %v597
        %v601 = vmul.f32 %v223, %v597
        %606 = vrot.lane.b32.xlu0 %v598, 91
        %v607 = vpop.permute.xlu0 %606
        %608 = vrot.lane.b32.xlu0 %v599, 91
        %v609 = vpop.permute.xlu0 %608
        %610 = vrot.lane.b32.xlu0 %v600, 91
        %v611 = vpop.permute.xlu0 %610
        %612 = vrot.lane.b32.xlu0 %v601, 91
        %v613 = vpop.permute.xlu0 %612
        %v614 = vsel %vm585, %v607, %v609
        %v615 = vsel %vm585, %v609, %v611
        %v616 = vsel %vm585, %v611, %v613
        %v620 = vadd.f32 %v563, %v614
        %v621 = vadd.f32 %v564, %v615
        %v622 = vadd.f32 %v565, %v616
        %s623 = sadd.s32 %s200, 8
        %s624 = sld [smem:[#allocation6 + %s623]]
        %v625 = vstv %s624
        %v626 = vmul.f32 %v220, %v625
        %v627 = vmul.f32 %v221, %v625
        %v628 = vmul.f32 %v222, %v625
        %v629 = vmul.f32 %v223, %v625
        %634 = vrot.lane.b32.xlu0 %v626, 90
        %v635 = vpop.permute.xlu0 %634
        %636 = vrot.lane.b32.xlu0 %v627, 90
        %v637 = vpop.permute.xlu0 %636
        %638 = vrot.lane.b32.xlu0 %v628, 90
        %v639 = vpop.permute.xlu0 %638
        %640 = vrot.lane.b32.xlu0 %v629, 90
        %v641 = vpop.permute.xlu0 %640
        %vm642 = vcmask 736256
        %v643 = vsel %vm642, %v635, %v637
        %v644 = vsel %vm642, %v637, %v639
        %v645 = vsel %vm642, %v639, %v641
        %v649 = vadd.f32 %v592, %v643
        %v650 = vadd.f32 %v593, %v644
        %v651 = vadd.f32 %v594, %v645
        %s652 = sadd.s32 %s211, 8
        %s653 = sld [smem:[#allocation6 + %s652]]
        %v654 = vstv %s653
        %v655 = vmul.f32 %v220, %v654
        %v656 = vmul.f32 %v221, %v654
        %v657 = vmul.f32 %v222, %v654
        %v658 = vmul.f32 %v223, %v654
        %663 = vrot.lane.b32.xlu0 %v655, 90
        %v664 = vpop.permute.xlu0 %663
        %665 = vrot.lane.b32.xlu0 %v656, 90
        %v666 = vpop.permute.xlu0 %665
        %667 = vrot.lane.b32.xlu0 %v657, 90
        %v668 = vpop.permute.xlu0 %667
        %669 = vrot.lane.b32.xlu0 %v658, 90
        %v670 = vpop.permute.xlu0 %669
        %v671 = vsel %vm642, %v664, %v666
        %v672 = vsel %vm642, %v666, %v668
        %v673 = vsel %vm642, %v668, %v670
        %v677 = vadd.f32 %v620, %v671
        %v678 = vadd.f32 %v621, %v672
        %v679 = vadd.f32 %v622, %v673
        %680 = vst [vmem:[%s194] sm:$0xff] %v649
        %681 = vst [vmem:[%s194 + $0x8] sm:$0xff] %v650
        %682 = vst [vmem:[%s194 + $0x10] sm:$0xff] %v651
        %s683 = scalar_lea.vmem %s194, 24 [#allocation7]
        %684 = vst [vmem:[%s683] sm:$0xff] %v677
        %685 = vst [vmem:[%s683 + $0x8] sm:$0xff] %v678
        %686 = vst [vmem:[%s683 + $0x10] sm:$0xff] %v679
        %s687 = smul.u32 %s24, 2
        %s688 = sadd.s32 %s687, 1
        %s689 = scalar_lea.vmem %s169, 32 [#allocation2]
        %v690 = vld [vmem:[%s689] sm:$0xff]
        %v691 = vld [vmem:[%s689 + $0x8] sm:$0xff]
        %v692 = vld [vmem:[%s689 + $0x10] sm:$0xff]
        %s693 = smul.u32 %s688, 18
        %s694 = sld [smem:[#allocation6 + %s693]]
        %v695 = vstv %s694
        %v696 = vmul.f32 %v690, %v695
        %v697 = vmul.f32 %v691, %v695
        %v698 = vmul.f32 %v692, %v695
        %v699 = vadd.f32 %v696, 0.0
        %v700 = vadd.f32 %v697, 0.0
        %v701 = vadd.f32 %v698, 0.0
        %s702 = smul.u32 %s688, 2
        %s703 = sadd.s32 %s702, 1
        %s704 = smul.u32 %s703, 9
        %s705 = sld [smem:[#allocation6 + %s704]]
        %v706 = vstv %s705
        %v707 = vmul.f32 %v690, %v706
        %v708 = vmul.f32 %v691, %v706
        %v709 = vmul.f32 %v692, %v706
        %v710 = vadd.f32 %v707, 0.0
        %v711 = vadd.f32 %v708, 0.0
        %v712 = vadd.f32 %v709, 0.0
        %v713 = vld [vmem:[%s689] sm:$0xff]
        %v714 = vld [vmem:[%s689 + $0x8] sm:$0xff]
        %v715 = vld [vmem:[%s689 + $0x10] sm:$0xff]
        %v716 = vld [vmem:[%s689 + $0x18] sm:$0xff]
        %s717 = sadd.s32 %s693, 1
        %s718 = sld [smem:[#allocation6 + %s717]]
        %v719 = vstv %s718
        %v720 = vmul.f32 %v713, %v719
        %v721 = vmul.f32 %v714, %v719
        %v722 = vmul.f32 %v715, %v719
        %v723 = vmul.f32 %v716, %v719
        %728 = vrot.lane.b32.xlu0 %v720, 127
        %v729 = vpop.permute.xlu0 %728
        %730 = vrot.lane.b32.xlu0 %v721, 127
        %v731 = vpop.permute.xlu0 %730
        %732 = vrot.lane.b32.xlu0 %v722, 127
        %v733 = vpop.permute.xlu0 %732
        %734 = vrot.lane.b32.xlu0 %v723, 127
        %v735 = vpop.permute.xlu0 %734
        %v736 = vsel %vm243, %v729, %v731
        %v737 = vsel %vm243, %v731, %v733
        %v738 = vsel %vm243, %v733, %v735
        %v742 = vadd.f32 %v699, %v736
        %v743 = vadd.f32 %v700, %v737
        %v744 = vadd.f32 %v701, %v738
        %s745 = sadd.s32 %s704, 1
        %s746 = sld [smem:[#allocation6 + %s745]]
        %v747 = vstv %s746
        %v748 = vmul.f32 %v713, %v747
        %v749 = vmul.f32 %v714, %v747
        %v750 = vmul.f32 %v715, %v747
        %v751 = vmul.f32 %v716, %v747
        %756 = vrot.lane.b32.xlu0 %v748, 127
        %v757 = vpop.permute.xlu0 %756
        %758 = vrot.lane.b32.xlu0 %v749, 127
        %v759 = vpop.permute.xlu0 %758
        %760 = vrot.lane.b32.xlu0 %v750, 127
        %v761 = vpop.permute.xlu0 %760
        %762 = vrot.lane.b32.xlu0 %v751, 127
        %v763 = vpop.permute.xlu0 %762
        %v764 = vsel %vm243, %v757, %v759
        %v765 = vsel %vm243, %v759, %v761
        %v766 = vsel %vm243, %v761, %v763
        %v770 = vadd.f32 %v710, %v764
        %v771 = vadd.f32 %v711, %v765
        %v772 = vadd.f32 %v712, %v766
        %s773 = sadd.s32 %s693, 2
        %s774 = sld [smem:[#allocation6 + %s773]]
        %v775 = vstv %s774
        %v776 = vmul.f32 %v713, %v775
        %v777 = vmul.f32 %v714, %v775
        %v778 = vmul.f32 %v715, %v775
        %v779 = vmul.f32 %v716, %v775
        %784 = vrot.lane.b32.xlu0 %v776, 126
        %v785 = vpop.permute.xlu0 %784
        %786 = vrot.lane.b32.xlu0 %v777, 126
        %v787 = vpop.permute.xlu0 %786
        %788 = vrot.lane.b32.xlu0 %v778, 126
        %v789 = vpop.permute.xlu0 %788
        %790 = vrot.lane.b32.xlu0 %v779, 126
        %v791 = vpop.permute.xlu0 %790
        %v792 = vsel %vm300, %v785, %v787
        %v793 = vsel %vm300, %v787, %v789
        %v794 = vsel %vm300, %v789, %v791
        %v798 = vadd.f32 %v742, %v792
        %v799 = vadd.f32 %v743, %v793
        %v800 = vadd.f32 %v744, %v794
        %s801 = sadd.s32 %s704, 2
        %s802 = sld [smem:[#allocation6 + %s801]]
        %v803 = vstv %s802
        %v804 = vmul.f32 %v713, %v803
        %v805 = vmul.f32 %v714, %v803
        %v806 = vmul.f32 %v715, %v803
        %v807 = vmul.f32 %v716, %v803
        %812 = vrot.lane.b32.xlu0 %v804, 126
        %v813 = vpop.permute.xlu0 %812
        %814 = vrot.lane.b32.xlu0 %v805, 126
        %v815 = vpop.permute.xlu0 %814
        %816 = vrot.lane.b32.xlu0 %v806, 126
        %v817 = vpop.permute.xlu0 %816
        %818 = vrot.lane.b32.xlu0 %v807, 126
        %v819 = vpop.permute.xlu0 %818
        %v820 = vsel %vm300, %v813, %v815
        %v821 = vsel %vm300, %v815, %v817
        %v822 = vsel %vm300, %v817, %v819
        %v826 = vadd.f32 %v770, %v820
        %v827 = vadd.f32 %v771, %v821
        %v828 = vadd.f32 %v772, %v822
        %s829 = sadd.s32 %s693, 3
        %s830 = sld [smem:[#allocation6 + %s829]]
        %v831 = vstv %s830
        %v832 = vmul.f32 %v713, %v831
        %v833 = vmul.f32 %v714, %v831
        %v834 = vmul.f32 %v715, %v831
        %v835 = vmul.f32 %v716, %v831
        %840 = vrot.lane.b32.xlu0 %v832, 110
        %v841 = vpop.permute.xlu0 %840
        %842 = vrot.lane.b32.xlu0 %v833, 110
        %v843 = vpop.permute.xlu0 %842
        %844 = vrot.lane.b32.xlu0 %v834, 110
        %v845 = vpop.permute.xlu0 %844
        %846 = vrot.lane.b32.xlu0 %v835, 110
        %v847 = vpop.permute.xlu0 %846
        %v848 = vsel %vm357, %v841, %v843
        %v849 = vsel %vm357, %v843, %v845
        %v850 = vsel %vm357, %v845, %v847
        %v854 = vadd.f32 %v798, %v848
        %v855 = vadd.f32 %v799, %v849
        %v856 = vadd.f32 %v800, %v850
        %s857 = sadd.s32 %s704, 3
        %s858 = sld [smem:[#allocation6 + %s857]]
        %v859 = vstv %s858
        %v860 = vmul.f32 %v713, %v859
        %v861 = vmul.f32 %v714, %v859
        %v862 = vmul.f32 %v715, %v859
        %v863 = vmul.f32 %v716, %v859
        %868 = vrot.lane.b32.xlu0 %v860, 110
        %v869 = vpop.permute.xlu0 %868
        %870 = vrot.lane.b32.xlu0 %v861, 110
        %v871 = vpop.permute.xlu0 %870
        %872 = vrot.lane.b32.xlu0 %v862, 110
        %v873 = vpop.permute.xlu0 %872
        %874 = vrot.lane.b32.xlu0 %v863, 110
        %v875 = vpop.permute.xlu0 %874
        %v876 = vsel %vm357, %v869, %v871
        %v877 = vsel %vm357, %v871, %v873
        %v878 = vsel %vm357, %v873, %v875
        %v882 = vadd.f32 %v826, %v876
        %v883 = vadd.f32 %v827, %v877
        %v884 = vadd.f32 %v828, %v878
        %s885 = sadd.s32 %s693, 4
        %s886 = sld [smem:[#allocation6 + %s885]]
        %v887 = vstv %s886
        %v888 = vmul.f32 %v713, %v887
        %v889 = vmul.f32 %v714, %v887
        %v890 = vmul.f32 %v715, %v887
        %v891 = vmul.f32 %v716, %v887
        %896 = vrot.lane.b32.xlu0 %v888, 109
        %v897 = vpop.permute.xlu0 %896
        %898 = vrot.lane.b32.xlu0 %v889, 109
        %v899 = vpop.permute.xlu0 %898
        %900 = vrot.lane.b32.xlu0 %v890, 109
        %v901 = vpop.permute.xlu0 %900
        %902 = vrot.lane.b32.xlu0 %v891, 109
        %v903 = vpop.permute.xlu0 %902
        %v904 = vsel %vm414, %v897, %v899
        %v905 = vsel %vm414, %v899, %v901
        %v906 = vsel %vm414, %v901, %v903
        %v910 = vadd.f32 %v854, %v904
        %v911 = vadd.f32 %v855, %v905
        %v912 = vadd.f32 %v856, %v906
        %s913 = sadd.s32 %s704, 4
        %s914 = sld [smem:[#allocation6 + %s913]]
        %v915 = vstv %s914
        %v916 = vmul.f32 %v713, %v915
        %v917 = vmul.f32 %v714, %v915
        %v918 = vmul.f32 %v715, %v915
        %v919 = vmul.f32 %v716, %v915
        %924 = vrot.lane.b32.xlu0 %v916, 109
        %v925 = vpop.permute.xlu0 %924
        %926 = vrot.lane.b32.xlu0 %v917, 109
        %v927 = vpop.permute.xlu0 %926
        %928 = vrot.lane.b32.xlu0 %v918, 109
        %v929 = vpop.permute.xlu0 %928
        %930 = vrot.lane.b32.xlu0 %v919, 109
        %v931 = vpop.permute.xlu0 %930
        %v932 = vsel %vm414, %v925, %v927
        %v933 = vsel %vm414, %v927, %v929
        %v934 = vsel %vm414, %v929, %v931
        %v938 = vadd.f32 %v882, %v932
        %v939 = vadd.f32 %v883, %v933
        %v940 = vadd.f32 %v884, %v934
        %s941 = sadd.s32 %s693, 5
        %s942 = sld [smem:[#allocation6 + %s941]]
        %v943 = vstv %s942
        %v944 = vmul.f32 %v713, %v943
        %v945 = vmul.f32 %v714, %v943
        %v946 = vmul.f32 %v715, %v943
        %v947 = vmul.f32 %v716, %v943
        %952 = vrot.lane.b32.xlu0 %v944, 108
        %v953 = vpop.permute.xlu0 %952
        %954 = vrot.lane.b32.xlu0 %v945, 108
        %v955 = vpop.permute.xlu0 %954
        %956 = vrot.lane.b32.xlu0 %v946, 108
        %v957 = vpop.permute.xlu0 %956
        %958 = vrot.lane.b32.xlu0 %v947, 108
        %v959 = vpop.permute.xlu0 %958
        %v960 = vsel %vm471, %v953, %v955
        %v961 = vsel %vm471, %v955, %v957
        %v962 = vsel %vm471, %v957, %v959
        %v966 = vadd.f32 %v910, %v960
        %v967 = vadd.f32 %v911, %v961
        %v968 = vadd.f32 %v912, %v962
        %s969 = sadd.s32 %s704, 5
        %s970 = sld [smem:[#allocation6 + %s969]]
        %v971 = vstv %s970
        %v972 = vmul.f32 %v713, %v971
        %v973 = vmul.f32 %v714, %v971
        %v974 = vmul.f32 %v715, %v971
        %v975 = vmul.f32 %v716, %v971
        %980 = vrot.lane.b32.xlu0 %v972, 108
        %v981 = vpop.permute.xlu0 %980
        %982 = vrot.lane.b32.xlu0 %v973, 108
        %v983 = vpop.permute.xlu0 %982
        %984 = vrot.lane.b32.xlu0 %v974, 108
        %v985 = vpop.permute.xlu0 %984
        %986 = vrot.lane.b32.xlu0 %v975, 108
        %v987 = vpop.permute.xlu0 %986
        %v988 = vsel %vm471, %v981, %v983
        %v989 = vsel %vm471, %v983, %v985
        %v990 = vsel %vm471, %v985, %v987
        %v994 = vadd.f32 %v938, %v988
        %v995 = vadd.f32 %v939, %v989
        %v996 = vadd.f32 %v940, %v990
        %s997 = sadd.s32 %s693, 6
        %s998 = sld [smem:[#allocation6 + %s997]]
        %v999 = vstv %s998
        %v1000 = vmul.f32 %v713, %v999
        %v1001 = vmul.f32 %v714, %v999
        %v1002 = vmul.f32 %v715, %v999
        %v1003 = vmul.f32 %v716, %v999
        %1008 = vrot.lane.b32.xlu0 %v1000, 92
        %v1009 = vpop.permute.xlu0 %1008
        %1010 = vrot.lane.b32.xlu0 %v1001, 92
        %v1011 = vpop.permute.xlu0 %1010
        %1012 = vrot.lane.b32.xlu0 %v1002, 92
        %v1013 = vpop.permute.xlu0 %1012
        %1014 = vrot.lane.b32.xlu0 %v1003, 92
        %v1015 = vpop.permute.xlu0 %1014
        %v1016 = vsel %vm528, %v1009, %v1011
        %v1017 = vsel %vm528, %v1011, %v1013
        %v1018 = vsel %vm528, %v1013, %v1015
        %v1022 = vadd.f32 %v966, %v1016
        %v1023 = vadd.f32 %v967, %v1017
        %v1024 = vadd.f32 %v968, %v1018
        %s1025 = sadd.s32 %s704, 6
        %s1026 = sld [smem:[#allocation6 + %s1025]]
        %v1027 = vstv %s1026
        %v1028 = vmul.f32 %v713, %v1027
        %v1029 = vmul.f32 %v714, %v1027
        %v1030 = vmul.f32 %v715, %v1027
        %v1031 = vmul.f32 %v716, %v1027
        %1036 = vrot.lane.b32.xlu0 %v1028, 92
        %v1037 = vpop.permute.xlu0 %1036
        %1038 = vrot.lane.b32.xlu0 %v1029, 92
        %v1039 = vpop.permute.xlu0 %1038
        %1040 = vrot.lane.b32.xlu0 %v1030, 92
        %v1041 = vpop.permute.xlu0 %1040
        %1042 = vrot.lane.b32.xlu0 %v1031, 92
        %v1043 = vpop.permute.xlu0 %1042
        %v1044 = vsel %vm528, %v1037, %v1039
        %v1045 = vsel %vm528, %v1039, %v1041
        %v1046 = vsel %vm528, %v1041, %v1043
        %v1050 = vadd.f32 %v994, %v1044
        %v1051 = vadd.f32 %v995, %v1045
        %v1052 = vadd.f32 %v996, %v1046
        %s1053 = sadd.s32 %s693, 7
        %s1054 = sld [smem:[#allocation6 + %s1053]]
        %v1055 = vstv %s1054
        %v1056 = vmul.f32 %v713, %v1055
        %v1057 = vmul.f32 %v714, %v1055
        %v1058 = vmul.f32 %v715, %v1055
        %v1059 = vmul.f32 %v716, %v1055
        %1064 = vrot.lane.b32.xlu0 %v1056, 91
        %v1065 = vpop.permute.xlu0 %1064
        %1066 = vrot.lane.b32.xlu0 %v1057, 91
        %v1067 = vpop.permute.xlu0 %1066
        %1068 = vrot.lane.b32.xlu0 %v1058, 91
        %v1069 = vpop.permute.xlu0 %1068
        %1070 = vrot.lane.b32.xlu0 %v1059, 91
        %v1071 = vpop.permute.xlu0 %1070
        %v1072 = vsel %vm585, %v1065, %v1067
        %v1073 = vsel %vm585, %v1067, %v1069
        %v1074 = vsel %vm585, %v1069, %v1071
        %v1078 = vadd.f32 %v1022, %v1072
        %v1079 = vadd.f32 %v1023, %v1073
        %v1080 = vadd.f32 %v1024, %v1074
        %s1081 = sadd.s32 %s704, 7
        %s1082 = sld [smem:[#allocation6 + %s1081]]
        %v1083 = vstv %s1082
        %v1084 = vmul.f32 %v713, %v1083
        %v1085 = vmul.f32 %v714, %v1083
        %v1086 = vmul.f32 %v715, %v1083
        %v1087 = vmul.f32 %v716, %v1083
        %1092 = vrot.lane.b32.xlu0 %v1084, 91
        %v1093 = vpop.permute.xlu0 %1092
        %1094 = vrot.lane.b32.xlu0 %v1085, 91
        %v1095 = vpop.permute.xlu0 %1094
        %1096 = vrot.lane.b32.xlu0 %v1086, 91
        %v1097 = vpop.permute.xlu0 %1096
        %1098 = vrot.lane.b32.xlu0 %v1087, 91
        %v1099 = vpop.permute.xlu0 %1098
        %v1100 = vsel %vm585, %v1093, %v1095
        %v1101 = vsel %vm585, %v1095, %v1097
        %v1102 = vsel %vm585, %v1097, %v1099
        %v1106 = vadd.f32 %v1050, %v1100
        %v1107 = vadd.f32 %v1051, %v1101
        %v1108 = vadd.f32 %v1052, %v1102
        %s1109 = sadd.s32 %s693, 8
        %s1110 = sld [smem:[#allocation6 + %s1109]]
        %v1111 = vstv %s1110
        %v1112 = vmul.f32 %v713, %v1111
        %v1113 = vmul.f32 %v714, %v1111
        %v1114 = vmul.f32 %v715, %v1111
        %v1115 = vmul.f32 %v716, %v1111
        %1120 = vrot.lane.b32.xlu0 %v1112, 90
        %v1121 = vpop.permute.xlu0 %1120
        %1122 = vrot.lane.b32.xlu0 %v1113, 90
        %v1123 = vpop.permute.xlu0 %1122
        %1124 = vrot.lane.b32.xlu0 %v1114, 90
        %v1125 = vpop.permute.xlu0 %1124
        %1126 = vrot.lane.b32.xlu0 %v1115, 90
        %v1127 = vpop.permute.xlu0 %1126
        %v1128 = vsel %vm642, %v1121, %v1123
        %v1129 = vsel %vm642, %v1123, %v1125
        %v1130 = vsel %vm642, %v1125, %v1127
        %v1134 = vadd.f32 %v1078, %v1128
        %v1135 = vadd.f32 %v1079, %v1129
        %v1136 = vadd.f32 %v1080, %v1130
        %s1137 = sadd.s32 %s704, 8
        %s1138 = sld [smem:[#allocation6 + %s1137]]
        %v1139 = vstv %s1138
        %v1140 = vmul.f32 %v713, %v1139
        %v1141 = vmul.f32 %v714, %v1139
        %v1142 = vmul.f32 %v715, %v1139
        %v1143 = vmul.f32 %v716, %v1139
        %1148 = vrot.lane.b32.xlu0 %v1140, 90
        %v1149 = vpop.permute.xlu0 %1148
        %1150 = vrot.lane.b32.xlu0 %v1141, 90
        %v1151 = vpop.permute.xlu0 %1150
        %1152 = vrot.lane.b32.xlu0 %v1142, 90
        %v1153 = vpop.permute.xlu0 %1152
        %1154 = vrot.lane.b32.xlu0 %v1143, 90
        %v1155 = vpop.permute.xlu0 %1154
        %v1156 = vsel %vm642, %v1149, %v1151
        %v1157 = vsel %vm642, %v1151, %v1153
        %v1158 = vsel %vm642, %v1153, %v1155
        %v1162 = vadd.f32 %v1106, %v1156
        %v1163 = vadd.f32 %v1107, %v1157
        %v1164 = vadd.f32 %v1108, %v1158
        %s1165 = scalar_lea.vmem %s194, 48 [#allocation7]
        %1166 = vst [vmem:[%s1165] sm:$0xff] %v1134
        %1167 = vst [vmem:[%s1165 + $0x8] sm:$0xff] %v1135
        %1168 = vst [vmem:[%s1165 + $0x10] sm:$0xff] %v1136
        %s1169 = scalar_lea.vmem %s194, 72 [#allocation7]
        %1170 = vst [vmem:[%s1169] sm:$0xff] %v1162
        %1171 = vst [vmem:[%s1169 + $0x8] sm:$0xff] %v1163
        %1172 = vst [vmem:[%s1169 + $0x10] sm:$0xff] %v1164
        %s1173 = sand.u32 %s91, 1
        %s1174 = scalar_lea.sflag [#allocation4], %s1173
        %s1175 = sand.u32 %s91, 1
        %s1176 = smul.addr %s1175, 96
        %s1177 = scalar_lea.vmem [#allocation7], %s1176
        // Predicated region
        $region37: #{tpu_custom_call.1} parent=27 // pred_check
          %p1178 = pneg %p101
        $region38: #{tpu_custom_call.1} parent=27 // pred_check_branch
          %1180 = sbr.rel (%p1178) target = $region40
        $region39: #{tpu_custom_call.1} parent=27 // pred_region
          %s1181 = smul.u32 2, %s24
          %s1183 = ssub.s32 1536, 1536
          %1184 = vsyncadd %s1174, %s1183
          %s1185 = smul.addr %s25, 3
          %s1186 = smul.addr %s1181, 6
          %s1187 = sadd.s32 %s1185, %s1186
          %s1188 = smul.addr %s1187, 128
          %s1189 = scalar_lea.hbm %s2, %s1188
          %s1190 = sshll.u32 %s1177, 4
          %s1191 = int_to_ptr.vmem [resolvable:$true] %s1190
          %1196 = dma.vmem_to_hbm [thread:$0]  %s1191, 1536, %s1189, %s1174, 384, 384, 24
        $region40: #{tpu_custom_call.1} parent=27 // pred_fallthru
          _
      $region28: #{tpu_custom_call.1} parent=5 // pred_fallthru
        _
      %p1197 = scmp.le.s32.totalorder 2, %s15
      // Predicated region
      $region41: #{tpu_custom_call.1} parent=5 // pred_check
        %p1198 = pneg %p1197
      $region42: #{tpu_custom_call.1} parent=5 // pred_check_branch
        %1200 = sbr.rel (%p1198) target = $region44
      $region43: #{tpu_custom_call.1} parent=5 // pred_region
        %s1201 = ssub.s32 %s15, 2
        // Predicated region
        $region45: #{tpu_custom_call.1} parent=43 // pred_check
          %p1202 = pneg %p107
        $region46: #{tpu_custom_call.1} parent=43 // pred_check_branch
          %1204 = sbr.rel (%p1202) target = $region48
        $region47: #{tpu_custom_call.1} parent=43 // pred_region
          %s1205 = sand.u32 %s92, 1
          %s1206 = scalar_lea.sflag [#allocation4], %s1205
          %s1207 = sand.u32 %s92, 1
          %s1208 = smul.addr %s1207, 96
          %s1209 = scalar_lea.vmem [#allocation7], %s1208
          %1210 = dma.done %s1206, 1536
        $region48: #{tpu_custom_call.1} parent=43 // pred_fallthru
          _
      $region44: #{tpu_custom_call.1} parent=5 // pred_fallthru
        _
    $region6: #{tpu_custom_call.1} parent=1 // loop_footer
      %s19 = sadd.s32 1, %s15
    $region7: #{tpu_custom_call.1} parent=1 // loop_footer_branch
      %14 = sbr.rel target = $region3
    $region8: #{tpu_custom_call.1} parent=1 // loop_exit
      _
    %1211 = vsyncpa [#allocation3], 1
    %s1212 = scalar_lea.sflag [#allocation3], 1
    %1213 = vsyncpa %s1212, 1
    %1214 = vsyncpa [#allocation4], 1
    %s1215 = scalar_lea.sflag [#allocation4], 1
    %1216 = vsyncpa %s1215, 1
    %1217 = vsyncpa [#allocation5], 1
    %s1218 = scalar_lea.sflag [#allocation5], 1
    %1219 = vsyncpa %s1218, 1

</llo_original>
